<compile_context>
chip_gen: v7x
topology: tpu7x:2x2x1
jax: 0.10.0
libtpu: 0.0.40
codegen_flags: <defaults>
</compile_context>

<pallas_src>
import functools

import jax
import jax.numpy as jnp
from jax.experimental import pallas as pl
from jax.experimental.pallas import tpu as pltpu

EPS = 1e-8
LANE = 128


def _ceil_to(n, m):
    return ((n + m - 1) // m) * m


def temporal_block_kernel(
    x_ref,        # (Mb, K, Bp) VMEM  per-step input block, f32 (residual)
    w1_ref,       # (Bp, Hp)    VMEM  1x1 conv weight (transposed torch (H,B,1))
    a1_ref,       # (1,)        SMEM  PReLU #1 alpha
    g1_ref,       # (1, Hp)     VMEM  gLN #1 gamma (zero padded)
    b1_ref,       # (1, Hp)     VMEM  gLN #1 beta  (zero padded)
    wd_ref,       # (P, Hp)     VMEM  depthwise conv weight (transposed torch (H,1,P))
    a2_ref,       # (1,)        SMEM  PReLU #2 alpha
    g2_ref,       # (1, Hp)     VMEM  gLN #2 gamma
    b2_ref,       # (1, Hp)     VMEM  gLN #2 beta
    wp_ref,       # (Hp, Bp)    VMEM  pointwise conv weight (transposed torch (B,H,1))
    o_ref,        # (Mb, K, Bp) VMEM  output block, f32
    *,
    K, inv_n, padding, dilation, P, compute_dtype, act_dtype, use_roll,
):
    Mb = x_ref.shape[0]
    Bp = x_ref.shape[2]
    Hp = w1_ref.shape[1]
    MK = Mb * K

    x = x_ref[...]                                              # (Mb, K, Bp) f32

    # ---- 1x1 conv (B -> H): one big MXU matmul over all Mb*K rows, f32 acc ----
    y = jnp.dot(x.reshape(MK, Bp).astype(compute_dtype), w1_ref[...],
                preferred_element_type=jnp.float32)             # (MK, Hp) f32

    # ---- PReLU #1 (alpha from SMEM scalar path) ----
    a1 = a1_ref[0]
    y = jnp.where(y >= 0.0, y, a1 * y)

    # ---- gLN #1: per-sample stats (time-axis partials, then lane reduce), f32;
    #      application folded into a per-channel scale/bias FMA ----
    y3 = y.reshape(Mb, K, Hp)
    ps1 = jnp.sum(y3, axis=1)                                   # (Mb, Hp)
    ps2 = jnp.sum(y3 * y3, axis=1)                              # (Mb, Hp)
    s1 = jnp.sum(ps1, axis=1, keepdims=True)                    # (Mb, 1)
    s2 = jnp.sum(ps2, axis=1, keepdims=True)
    mean = s1 * inv_n
    var = jnp.maximum(s2 * inv_n - mean * mean, 0.0)
    rstd = jax.lax.rsqrt(var + EPS)                             # (Mb, 1)
    scale = g1_ref[...][None, :, :] * rstd[:, :, None]          # (Mb, 1, Hp)
    shift = b1_ref[...][None, :, :] - mean[:, :, None] * scale
    ya = (y3 * scale + shift).astype(act_dtype).reshape(MK, Hp)

    # ---- depthwise dilated conv, symmetric 'same' padding ----
    # tap_p[k] = y[k + p*dilation - padding] (zero outside [0, K)), built either via
    # XLU roll + iota mask (fast path) or concatenate + mask (fallback).
    wd = wd_ref[...].astype(act_dtype)
    k_idx = jax.lax.broadcasted_iota(jnp.int32, (MK, 1), 0)     # flattened row index
    if Mb > 1:
        k_idx = k_idx % K                                       # within-sample time idx
    zero = jnp.zeros([], act_dtype)

    z = None
    for p in range(P):                                          # static, tiny P
        s = p * dilation - padding
        if s >= K or s <= -K:
            continue                                            # tap fully out of range
        if s == 0:
            tap = ya
        else:
            valid = (k_idx < K - s) if s > 0 else (k_idx >= -s)
            if use_roll:
                rolled = pltpu.roll(ya, shift=(-s) % MK, axis=0)
            else:
                if s > 0:
                    rolled = jnp.concatenate(
                        [ya[s:], jnp.zeros((s, Hp), act_dtype)], axis=0)
                else:
                    rolled = jnp.concatenate(
                        [jnp.zeros((-s, Hp), act_dtype), ya[:MK + s]], axis=0)
            tap = jnp.where(valid, rolled, zero)
        contrib = tap * wd[p]                                   # (Hp,) broadcast
        z = contrib if z is None else z + contrib
    if z is None:
        z = jnp.zeros((MK, Hp), act_dtype)

    # ---- PReLU #2 ----
    a2 = a2_ref[0].astype(z.dtype)
    z = jnp.where(z >= 0.0, z, a2 * z)

    # ---- gLN #2: stats in f32, folded scale/bias FMA ----
    z3 = z.reshape(Mb, K, Hp).astype(jnp.float32)
    qs1 = jnp.sum(z3, axis=1)
    qs2 = jnp.sum(z3 * z3, axis=1)
    t1 = jnp.sum(qs1, axis=1, keepdims=True)
    t2 = jnp.sum(qs2, axis=1, keepdims=True)
    mean2 = t1 * inv_n
    var2 = jnp.maximum(t2 * inv_n - mean2 * mean2, 0.0)
    rstd2 = jax.lax.rsqrt(var2 + EPS)
    scale2 = g2_ref[...][None, :, :] * rstd2[:, :, None]
    shift2 = b2_ref[...][None, :, :] - mean2[:, :, None] * scale2
    zn = z3 * scale2 + shift2                                   # (Mb, K, Hp) f32

    # ---- pointwise 1x1 conv (H -> B), f32 accumulation + f32 residual ----
    out = jnp.dot(zn.reshape(MK, Hp).astype(compute_dtype), wp_ref[...],
                  preferred_element_type=jnp.float32)           # (MK, Bp)
    o_ref[...] = out.reshape(Mb, K, Bp) + x


def temporal_block_time_major(x_mkb, params, *, kernel_size, dilation,
                              matmul_dtype=jnp.float32, act_dtype=jnp.float32):
    """Channel-last entry point. x_mkb: [M, K, B] float32. Returns [M, K, B]."""
    M, K, B = x_mkb.shape
    H = params["w1"].shape[0]                       # torch weight (H, B, 1)
    P = kernel_size
    padding = (P - 1) * dilation // 2               # non-causal "same" padding
    assert 2 * padding == dilation * (P - 1), \
        "same-length output requires (kernel_size-1)*dilation to be even"

    f32 = jnp.float32
    Bp = _ceil_to(B, LANE)
    Hp = _ceil_to(H, LANE)

    # Kernel-friendly, lane-padded parameter slabs.  Zero padding keeps the math
    # identical (padded channels stay exactly zero through every stage).
    w1 = jnp.pad(jnp.transpose(params["w1"][:, :, 0], (1, 0)),
                 ((0, Bp - B), (0, Hp - H))).astype(matmul_dtype)    # (Bp, Hp)
    wd = jnp.pad(jnp.transpose(params["wd"][:, 0, :], (1, 0)),
                 ((0, 0), (0, Hp - H))).astype(f32)                  # (P, Hp)
    wp = jnp.pad(jnp.transpose(params["wp"][:, :, 0], (1, 0)),
                 ((0, Hp - H), (0, Bp - B))).astype(matmul_dtype)    # (Hp, Bp)
    a1 = params["a1"].reshape(1).astype(f32)
    a2 = params["a2"].reshape(1).astype(f32)
    pad_h = lambda v: jnp.pad(v.reshape(1, H), ((0, 0), (0, Hp - H))).astype(f32)
    g1, b1 = pad_h(params["g1"]), pad_h(params["b1"])
    g2, b2 = pad_h(params["g2"]), pad_h(params["b2"])

    xp = x_mkb.astype(f32)
    if Bp != B:
        xp = jnp.pad(xp, ((0, 0), (0, 0), (0, Bp - B)))

    # ---- generation-aware VMEM budgeting and samples-per-step choice ----
    try:
        vmem_cap = int(pltpu.get_tpu_info().vmem_capacity_bytes)
    except Exception:
        vmem_cap = 64 << 20                           # conservative (v7x per-TC) default
    wbytes = jnp.dtype(matmul_dtype).itemsize
    abytes = jnp.dtype(act_dtype).itemsize

    def step_bytes(mb):
        io = 2 * 2 * mb * K * Bp * 4                              # x + out, double buffered
        weights = 2 * (2 * Bp * Hp * wbytes + (P + 4) * Hp * 4)   # (2x in case not Buffered(1))
        interm = mb * K * Hp * (4 * 4 + 3 * abytes)               # f32 slabs + act slabs
        return io + weights + interm

    budget = int(0.45 * vmem_cap)
    Mb = 1
    for cand in range(M, 0, -1):                      # largest divisor of M that fits
        if M % cand == 0 and step_bytes(cand) <= budget:
            Mb = cand
            break
    vmem_limit = int(min(max(int(1.4 * step_bytes(Mb)) + (2 << 20), 32 << 20),
                         int(0.9 * vmem_cap)))

    inv_n = 1.0 / float(K * H)                        # real (unpadded) normalizer

    def run(*, use_roll, single_buffer_weights):
        kernel = functools.partial(
            temporal_block_kernel,
            K=K, inv_n=inv_n, padding=padding, dilation=dilation, P=P,
            compute_dtype=matmul_dtype, act_dtype=act_dtype, use_roll=use_roll)

        def const_spec(shape):
            idx = lambda m, _shape=shape: tuple(0 for _ in _shape)
            if single_buffer_weights and hasattr(pl, "Buffered"):
                # Grid-invariant operand: never re-fetched -> single buffer.
                return pl.BlockSpec(shape, idx, pipeline_mode=pl.Buffered(1))
            return pl.BlockSpec(shape, idx)

        smem = lambda: pl.BlockSpec(memory_space=pltpu.MemorySpace.SMEM)

        out = pl.pallas_call(
            kernel,
            out_shape=jax.ShapeDtypeStruct((M, K, Bp), f32),
            grid_spec=pltpu.PrefetchScalarGridSpec(
                num_scalar_prefetch=0,
                grid=(M // Mb,),
                in_specs=[
                    pl.BlockSpec((Mb, K, Bp), lambda m: (m, 0, 0)),  # x block
                    const_spec((Bp, Hp)),                            # w1
                    smem(),                                          # a1
                    const_spec((1, Hp)),                             # g1
                    const_spec((1, Hp)),                             # b1
                    const_spec((P, Hp)),                             # wd
                    smem(),                                          # a2
                    const_spec((1, Hp)),                             # g2
                    const_spec((1, Hp)),                             # b2
                    const_spec((Hp, Bp)),                            # wp
                ],
                out_specs=pl.BlockSpec((Mb, K, Bp), lambda m: (m, 0, 0)),
            ),
            compiler_params=pltpu.CompilerParams(
                dimension_semantics=("parallel",),     # shard sample-blocks across TCs
                vmem_limit_bytes=vmem_limit,
            ),
        )(xp, w1, a1, g1, b1, wd, a2, g2, b2, wp)
        return jax.block_until_ready(out)

    try:
        out = run(use_roll=True, single_buffer_weights=True)
    except Exception:
        # Conservative fallback: concatenate-based taps, default double-buffered
        # weight specs.  Same math, guaranteed-to-lower path.
        out = run(use_roll=False, single_buffer_weights=False)

    return out[:, :, :B] if Bp != B else out


def temporal_block(x_mbk, params, *, kernel_size, dilation,
                   matmul_dtype=jnp.float32, act_dtype=jnp.float32):
    """PyTorch-layout wrapper. x_mbk: [M, B, K] float32. Returns [M, B, K]."""
    x_mkb = jnp.transpose(x_mbk, (0, 2, 1)).astype(jnp.float32)
    out = temporal_block_time_major(
        x_mkb, params, kernel_size=kernel_size, dilation=dilation,
        matmul_dtype=matmul_dtype, act_dtype=act_dtype)
    return jnp.transpose(out, (0, 2, 1))


# ---------------- pure-JAX reference (correctness check) ----------------
def ref_temporal_block(x, params, *, kernel_size, dilation):
    M, B, K = x.shape
    H = params["w1"].shape[0]
    P = kernel_size
    padding = (P - 1) * dilation // 2

    def gln(y, gamma, beta):   # y: [M, C, K]
        mean = jnp.mean(y, axis=(1, 2), keepdims=True)
        var = jnp.mean((y - mean) ** 2, axis=(1, 2), keepdims=True)
        return gamma.reshape(1, -1, 1) * (y - mean) / jnp.sqrt(var + EPS) + beta.reshape(1, -1, 1)

    prelu = lambda y, a: jnp.where(y >= 0.0, y, a * y)

    y = jnp.einsum("mbk,hb->mhk", x, params["w1"][:, :, 0])
    y = prelu(y, params["a1"])
    y = gln(y, params["g1"], params["b1"])

    ypad = jnp.pad(y, ((0, 0), (0, 0), (padding, padding)))
    z = jnp.zeros_like(y)
    for p in range(P):
        z = z + params["wd"][:, 0, p].reshape(1, H, 1) * ypad[:, :, p * dilation:p * dilation + K]

    z = prelu(z, params["a2"])
    z = gln(z, params["g2"], params["b2"])
    out = jnp.einsum("mhk,bh->mbk", z, params["wp"][:, :, 0])
    return out + x


if __name__ == "__main__":
    # TemporalBlock(in_channels=B, out_channels=H, kernel_size=3, stride=1,
    #               padding=(3-1)*dilation//2, dilation=2, norm_type='gLN', causal=False)
    M, B, H, K = 2, 4, 8, 16
    kernel_size, dilation = 3, 2

    key = jax.random.PRNGKey(0)
    k_x, k_w1, k_wd, k_wp = jax.random.split(key, 4)

    params = {
        "w1": 0.1 * jax.random.normal(k_w1, (H, B, 1), jnp.float32),            # conv1x1
        "a1": jnp.array(0.25, jnp.float32),                                     # PReLU init
        "g1": jnp.ones((H,), jnp.float32),
        "b1": jnp.zeros((H,), jnp.float32),
        "wd": 0.1 * jax.random.normal(k_wd, (H, 1, kernel_size), jnp.float32),  # depthwise
        "a2": jnp.array(0.25, jnp.float32),
        "g2": jnp.ones((H,), jnp.float32),
        "b2": jnp.zeros((H,), jnp.float32),
        "wp": 0.1 * jax.random.normal(k_wp, (B, H, 1), jnp.float32),            # pointwise
    }

    x = jax.random.normal(k_x, (M, B, K), jnp.float32)

    ref = ref_temporal_block(x, params, kernel_size=kernel_size, dilation=dilation)

    # Full-precision path: tight check against the reference.
    out_f32 = temporal_block(x, params, kernel_size=kernel_size, dilation=dilation)
    out_f32 = jax.block_until_ready(out_f32)
    assert out_f32.shape == (M, B, K)
    assert jnp.allclose(out_f32, ref, atol=1e-4, rtol=1e-4), "f32 mismatch vs reference"

    # bf16 MXU operands + bf16 depthwise-stage intermediates (f32 accumulation and
    # f32 gLN statistics/residual kept): looser tolerance.
    out_bf16 = temporal_block(x, params, kernel_size=kernel_size, dilation=dilation,
                              matmul_dtype=jnp.bfloat16, act_dtype=jnp.bfloat16)
    out_bf16 = jax.block_until_ready(out_bf16)
    assert jnp.allclose(out_bf16, ref, atol=1e-1, rtol=1e-1), "bf16 mismatch vs reference"

    print("KERNEL_OK")
</pallas_src>

<mosaic_0001>
module attributes {stable_mosaic.version = 11 : i64} {
  func.func @temporal_block_kernel(%arg0: i32, %arg1: memref<2x16x128xf32, #tpu.memory_space<vmem>>, %arg2: memref<128x128xf32, #tpu.memory_space<vmem>>, %arg3: memref<1xf32, #tpu.memory_space<smem>>, %arg4: memref<1x128xf32, #tpu.memory_space<vmem>>, %arg5: memref<1x128xf32, #tpu.memory_space<vmem>>, %arg6: memref<3x128xf32, #tpu.memory_space<vmem>>, %arg7: memref<1xf32, #tpu.memory_space<smem>>, %arg8: memref<1x128xf32, #tpu.memory_space<vmem>>, %arg9: memref<1x128xf32, #tpu.memory_space<vmem>>, %arg10: memref<128x128xf32, #tpu.memory_space<vmem>>, %arg11: memref<2x16x128xf32, #tpu.memory_space<vmem>>) attributes {dimension_semantics = [#tpu.dimension_semantics<parallel>], iteration_bounds = array<i64: 1>, scalar_prefetch = 0 : i64, scratch_operands = 0 : i64, tpu.core_type = #tpu.core_type<tc>, window_params = [{transform_indices = @transform_0, window_bounds = array<i64: 2, 16, 128>}, {pipeline_mode = #tpu.pipeline_mode<synchronous>, transform_indices = @transform_1, window_bounds = array<i64: 128, 128>}, {transform_indices = @transform_2, window_bounds = array<i64: 1>}, {pipeline_mode = #tpu.pipeline_mode<synchronous>, transform_indices = @transform_3, window_bounds = array<i64: 1, 128>}, {pipeline_mode = #tpu.pipeline_mode<synchronous>, transform_indices = @transform_4, window_bounds = array<i64: 1, 128>}, {pipeline_mode = #tpu.pipeline_mode<synchronous>, transform_indices = @transform_5, window_bounds = array<i64: 3, 128>}, {transform_indices = @transform_6, window_bounds = array<i64: 1>}, {pipeline_mode = #tpu.pipeline_mode<synchronous>, transform_indices = @transform_7, window_bounds = array<i64: 1, 128>}, {pipeline_mode = #tpu.pipeline_mode<synchronous>, transform_indices = @transform_8, window_bounds = array<i64: 1, 128>}, {pipeline_mode = #tpu.pipeline_mode<synchronous>, transform_indices = @transform_9, window_bounds = array<i64: 128, 128>}, {transform_indices = @transform_10, window_bounds = array<i64: 2, 16, 128>}]} {
    %c0 = arith.constant 0 : index
    %c0_0 = arith.constant 0 : index
    %c0_1 = arith.constant 0 : index
    %0 = vector.load %arg1[%c0, %c0_0, %c0_1] : memref<2x16x128xf32, #tpu.memory_space<vmem>>, vector<2x16x128xf32>
    %1 = vector.shape_cast %0 : vector<2x16x128xf32> to vector<32x128xf32>
    %c0_2 = arith.constant 0 : index
    %c0_3 = arith.constant 0 : index
    %2 = vector.load %arg2[%c0_2, %c0_3] : memref<128x128xf32, #tpu.memory_space<vmem>>, vector<128x128xf32>
    %cst = arith.constant dense<0.000000e+00> : vector<32x128xf32>
    %3 = tpu.matmul %1, %2, %cst {dimension_numbers = #tpu.dot_dimension_numbers<[1], [0], [0], [1], [0, 0, 1, 1], [], []>} : vector<32x128xf32>, vector<128x128xf32>, vector<32x128xf32> -> vector<32x128xf32>
    %c0_4 = arith.constant 0 : index
    %4 = memref.load %arg3[%c0_4] : memref<1xf32, #tpu.memory_space<smem>>
    %cst_5 = arith.constant 0.000000e+00 : f32
    %5 = vector.broadcast %cst_5 : f32 to vector<32x128xf32>
    %6 = arith.cmpf oge, %3, %5 : vector<32x128xf32>
    %7 = vector.broadcast %4 : f32 to vector<32x128xf32>
    %8 = arith.mulf %7, %3 : vector<32x128xf32>
    %9 = arith.select %6, %3, %8 : vector<32x128xi1>, vector<32x128xf32>
    %10 = vector.shape_cast %9 : vector<32x128xf32> to vector<2x16x128xf32>
    %cst_6 = arith.constant dense<0.000000e+00> : vector<2x128xf32>
    %11 = vector.multi_reduction <add>, %10, %cst_6 [1] : vector<2x16x128xf32> to vector<2x128xf32>
    %12 = arith.mulf %10, %10 : vector<2x16x128xf32>
    %cst_7 = arith.constant dense<0.000000e+00> : vector<2x128xf32>
    %13 = vector.multi_reduction <add>, %12, %cst_7 [1] : vector<2x16x128xf32> to vector<2x128xf32>
    %cst_8 = arith.constant dense<0.000000e+00> : vector<2xf32>
    %14 = vector.multi_reduction <add>, %11, %cst_8 [1] : vector<2x128xf32> to vector<2xf32>
    %15 = vector.shape_cast %14 : vector<2xf32> to vector<2x1xf32>
    %cst_9 = arith.constant dense<0.000000e+00> : vector<2xf32>
    %16 = vector.multi_reduction <add>, %13, %cst_9 [1] : vector<2x128xf32> to vector<2xf32>
    %17 = vector.shape_cast %16 : vector<2xf32> to vector<2x1xf32>
    %cst_10 = arith.constant 7.812500e-03 : f32
    %18 = vector.broadcast %cst_10 : f32 to vector<2x1xf32>
    %19 = arith.mulf %15, %18 : vector<2x1xf32>
    %cst_11 = arith.constant 7.812500e-03 : f32
    %20 = vector.broadcast %cst_11 : f32 to vector<2x1xf32>
    %21 = arith.mulf %17, %20 : vector<2x1xf32>
    %22 = arith.mulf %19, %19 : vector<2x1xf32>
    %23 = arith.subf %21, %22 : vector<2x1xf32>
    %cst_12 = arith.constant 0.000000e+00 : f32
    %24 = vector.broadcast %cst_12 : f32 to vector<2x1xf32>
    %25 = arith.maximumf %23, %24 : vector<2x1xf32>
    %cst_13 = arith.constant 9.99999993E-9 : f32
    %26 = vector.broadcast %cst_13 : f32 to vector<2x1xf32>
    %27 = arith.addf %25, %26 : vector<2x1xf32>
    %28 = math.rsqrt %27 : vector<2x1xf32>
    %c0_14 = arith.constant 0 : index
    %c0_15 = arith.constant 0 : index
    %29 = vector.load %arg4[%c0_14, %c0_15] : memref<1x128xf32, #tpu.memory_space<vmem>>, vector<1x128xf32>
    %30 = vector.shape_cast %29 : vector<1x128xf32> to vector<1x1x128xf32>
    %31 = vector.shape_cast %28 : vector<2x1xf32> to vector<2x1x1xf32>
    %32 = vector.broadcast %30 : vector<1x1x128xf32> to vector<2x1x128xf32>
    %33 = vector.broadcast %31 : vector<2x1x1xf32> to vector<2x1x128xf32>
    %34 = arith.mulf %32, %33 : vector<2x1x128xf32>
    %c0_16 = arith.constant 0 : index
    %c0_17 = arith.constant 0 : index
    %35 = vector.load %arg5[%c0_16, %c0_17] : memref<1x128xf32, #tpu.memory_space<vmem>>, vector<1x128xf32>
    %36 = vector.shape_cast %35 : vector<1x128xf32> to vector<1x1x128xf32>
    %37 = vector.shape_cast %19 : vector<2x1xf32> to vector<2x1x1xf32>
    %38 = vector.broadcast %37 : vector<2x1x1xf32> to vector<2x1x128xf32>
    %39 = arith.mulf %38, %34 : vector<2x1x128xf32>
    %40 = vector.broadcast %36 : vector<1x1x128xf32> to vector<2x1x128xf32>
    %41 = arith.subf %40, %39 : vector<2x1x128xf32>
    %42 = vector.broadcast %34 : vector<2x1x128xf32> to vector<2x16x128xf32>
    %43 = arith.mulf %10, %42 : vector<2x16x128xf32>
    %44 = vector.broadcast %41 : vector<2x1x128xf32> to vector<2x16x128xf32>
    %45 = arith.addf %43, %44 : vector<2x16x128xf32>
    %46 = vector.shape_cast %45 : vector<2x16x128xf32> to vector<32x128xf32>
    %c0_18 = arith.constant 0 : index
    %c0_19 = arith.constant 0 : index
    %47 = vector.load %arg6[%c0_18, %c0_19] : memref<3x128xf32, #tpu.memory_space<vmem>>, vector<3x128xf32>
    %48 = tpu.iota {dimensions = array<i32: 0>} : vector<32x1xi32>
    %c16_i32 = arith.constant 16 : i32
    %c0_i32 = arith.constant 0 : i32
    %49 = arith.cmpi eq, %c16_i32, %c0_i32 : i32
    %c1_i32 = arith.constant 1 : i32
    %50 = arith.select %49, %c1_i32, %c16_i32 : i32
    %51 = vector.broadcast %50 : i32 to vector<32x1xi32>
    %52 = arith.remsi %48, %51 : vector<32x1xi32>
    %c0_i32_20 = arith.constant 0 : i32
    %53 = vector.broadcast %c0_i32_20 : i32 to vector<32x1xi32>
    %54 = arith.cmpi ne, %52, %53 : vector<32x1xi32>
    %c0_i32_21 = arith.constant 0 : i32
    %55 = vector.broadcast %c0_i32_21 : i32 to vector<32x1xi32>
    %56 = arith.cmpi slt, %52, %55 : vector<32x1xi32>
    %c0_i32_22 = arith.constant 0 : i32
    %57 = arith.cmpi slt, %50, %c0_i32_22 : i32
    %58 = vector.broadcast %57 : i1 to vector<32x1xi1>
    %59 = vector.broadcast %58 : vector<32x1xi1> to vector<32x1xi1>
    %60 = arith.xori %56, %59 : vector<32x1xi1>
    %61 = arith.andi %60, %54 : vector<32x1xi1>
    %62 = vector.broadcast %50 : i32 to vector<32x1xi32>
    %63 = arith.addi %52, %62 : vector<32x1xi32>
    %64 = arith.select %61, %63, %52 : vector<32x1xi1>, vector<32x1xi32>
    %c2_i32 = arith.constant 2 : i32
    %65 = vector.broadcast %c2_i32 : i32 to vector<32x1xi32>
    %66 = arith.cmpi sge, %64, %65 : vector<32x1xi32>
    %c2_i32_23 = arith.constant 2 : i32
    %67 = tpu.dynamic_rotate %46 by %c2_i32_23 dim 0 : vector<32x128xf32>, i32 -> vector<32x128xf32>
    %cst_24 = arith.constant 0.000000e+00 : f32
    %68 = vector.shape_cast %66 : vector<32x1xi1> to vector<32x1xi1>
    %69 = vector.broadcast %68 : vector<32x1xi1> to vector<32x128xi1>
    %70 = vector.broadcast %cst_24 : f32 to vector<32x128xf32>
    %71 = arith.select %69, %67, %70 : vector<32x128xi1>, vector<32x128xf32>
    %72 = vector.extract_strided_slice %47 {offsets = [0, 0], sizes = [1, 128], strides = [1, 1]} : vector<3x128xf32> to vector<1x128xf32>
    %73 = vector.shape_cast %72 : vector<1x128xf32> to vector<128xf32>
    %74 = vector.shape_cast %73 : vector<128xf32> to vector<1x128xf32>
    %75 = vector.broadcast %74 : vector<1x128xf32> to vector<32x128xf32>
    %76 = arith.mulf %71, %75 : vector<32x128xf32>
    %77 = vector.extract_strided_slice %47 {offsets = [1, 0], sizes = [1, 128], strides = [1, 1]} : vector<3x128xf32> to vector<1x128xf32>
    %78 = vector.shape_cast %77 : vector<1x128xf32> to vector<128xf32>
    %79 = vector.shape_cast %78 : vector<128xf32> to vector<1x128xf32>
    %80 = vector.broadcast %79 : vector<1x128xf32> to vector<32x128xf32>
    %81 = arith.mulf %46, %80 : vector<32x128xf32>
    %82 = arith.addf %76, %81 : vector<32x128xf32>
    %c14_i32 = arith.constant 14 : i32
    %83 = vector.broadcast %c14_i32 : i32 to vector<32x1xi32>
    %84 = arith.cmpi slt, %64, %83 : vector<32x1xi32>
    %c30_i32 = arith.constant 30 : i32
    %85 = tpu.dynamic_rotate %46 by %c30_i32 dim 0 : vector<32x128xf32>, i32 -> vector<32x128xf32>
    %cst_25 = arith.constant 0.000000e+00 : f32
    %86 = vector.shape_cast %84 : vector<32x1xi1> to vector<32x1xi1>
    %87 = vector.broadcast %86 : vector<32x1xi1> to vector<32x128xi1>
    %88 = vector.broadcast %cst_25 : f32 to vector<32x128xf32>
    %89 = arith.select %87, %85, %88 : vector<32x128xi1>, vector<32x128xf32>
    %90 = vector.extract_strided_slice %47 {offsets = [2, 0], sizes = [1, 128], strides = [1, 1]} : vector<3x128xf32> to vector<1x128xf32>
    %91 = vector.shape_cast %90 : vector<1x128xf32> to vector<128xf32>
    %92 = vector.shape_cast %91 : vector<128xf32> to vector<1x128xf32>
    %93 = vector.broadcast %92 : vector<1x128xf32> to vector<32x128xf32>
    %94 = arith.mulf %89, %93 : vector<32x128xf32>
    %95 = arith.addf %82, %94 : vector<32x128xf32>
    %c0_26 = arith.constant 0 : index
    %96 = memref.load %arg7[%c0_26] : memref<1xf32, #tpu.memory_space<smem>>
    %cst_27 = arith.constant 0.000000e+00 : f32
    %97 = vector.broadcast %cst_27 : f32 to vector<32x128xf32>
    %98 = arith.cmpf oge, %95, %97 : vector<32x128xf32>
    %99 = vector.broadcast %96 : f32 to vector<32x128xf32>
    %100 = arith.mulf %99, %95 : vector<32x128xf32>
    %101 = arith.select %98, %95, %100 : vector<32x128xi1>, vector<32x128xf32>
    %102 = vector.shape_cast %101 : vector<32x128xf32> to vector<2x16x128xf32>
    %cst_28 = arith.constant dense<0.000000e+00> : vector<2x128xf32>
    %103 = vector.multi_reduction <add>, %102, %cst_28 [1] : vector<2x16x128xf32> to vector<2x128xf32>
    %104 = arith.mulf %102, %102 : vector<2x16x128xf32>
    %cst_29 = arith.constant dense<0.000000e+00> : vector<2x128xf32>
    %105 = vector.multi_reduction <add>, %104, %cst_29 [1] : vector<2x16x128xf32> to vector<2x128xf32>
    %cst_30 = arith.constant dense<0.000000e+00> : vector<2xf32>
    %106 = vector.multi_reduction <add>, %103, %cst_30 [1] : vector<2x128xf32> to vector<2xf32>
    %107 = vector.shape_cast %106 : vector<2xf32> to vector<2x1xf32>
    %cst_31 = arith.constant dense<0.000000e+00> : vector<2xf32>
    %108 = vector.multi_reduction <add>, %105, %cst_31 [1] : vector<2x128xf32> to vector<2xf32>
    %109 = vector.shape_cast %108 : vector<2xf32> to vector<2x1xf32>
    %cst_32 = arith.constant 7.812500e-03 : f32
    %110 = vector.broadcast %cst_32 : f32 to vector<2x1xf32>
    %111 = arith.mulf %107, %110 : vector<2x1xf32>
    %cst_33 = arith.constant 7.812500e-03 : f32
    %112 = vector.broadcast %cst_33 : f32 to vector<2x1xf32>
    %113 = arith.mulf %109, %112 : vector<2x1xf32>
    %114 = arith.mulf %111, %111 : vector<2x1xf32>
    %115 = arith.subf %113, %114 : vector<2x1xf32>
    %cst_34 = arith.constant 0.000000e+00 : f32
    %116 = vector.broadcast %cst_34 : f32 to vector<2x1xf32>
    %117 = arith.maximumf %115, %116 : vector<2x1xf32>
    %cst_35 = arith.constant 9.99999993E-9 : f32
    %118 = vector.broadcast %cst_35 : f32 to vector<2x1xf32>
    %119 = arith.addf %117, %118 : vector<2x1xf32>
    %120 = math.rsqrt %119 : vector<2x1xf32>
    %c0_36 = arith.constant 0 : index
    %c0_37 = arith.constant 0 : index
    %121 = vector.load %arg8[%c0_36, %c0_37] : memref<1x128xf32, #tpu.memory_space<vmem>>, vector<1x128xf32>
    %122 = vector.shape_cast %121 : vector<1x128xf32> to vector<1x1x128xf32>
    %123 = vector.shape_cast %120 : vector<2x1xf32> to vector<2x1x1xf32>
    %124 = vector.broadcast %122 : vector<1x1x128xf32> to vector<2x1x128xf32>
    %125 = vector.broadcast %123 : vector<2x1x1xf32> to vector<2x1x128xf32>
    %126 = arith.mulf %124, %125 : vector<2x1x128xf32>
    %c0_38 = arith.constant 0 : index
    %c0_39 = arith.constant 0 : index
    %127 = vector.load %arg9[%c0_38, %c0_39] : memref<1x128xf32, #tpu.memory_space<vmem>>, vector<1x128xf32>
    %128 = vector.shape_cast %127 : vector<1x128xf32> to vector<1x1x128xf32>
    %129 = vector.shape_cast %111 : vector<2x1xf32> to vector<2x1x1xf32>
    %130 = vector.broadcast %129 : vector<2x1x1xf32> to vector<2x1x128xf32>
    %131 = arith.mulf %130, %126 : vector<2x1x128xf32>
    %132 = vector.broadcast %128 : vector<1x1x128xf32> to vector<2x1x128xf32>
    %133 = arith.subf %132, %131 : vector<2x1x128xf32>
    %134 = vector.broadcast %126 : vector<2x1x128xf32> to vector<2x16x128xf32>
    %135 = arith.mulf %102, %134 : vector<2x16x128xf32>
    %136 = vector.broadcast %133 : vector<2x1x128xf32> to vector<2x16x128xf32>
    %137 = arith.addf %135, %136 : vector<2x16x128xf32>
    %138 = vector.shape_cast %137 : vector<2x16x128xf32> to vector<32x128xf32>
    %c0_40 = arith.constant 0 : index
    %c0_41 = arith.constant 0 : index
    %139 = vector.load %arg10[%c0_40, %c0_41] : memref<128x128xf32, #tpu.memory_space<vmem>>, vector<128x128xf32>
    %cst_42 = arith.constant dense<0.000000e+00> : vector<32x128xf32>
    %140 = tpu.matmul %138, %139, %cst_42 {dimension_numbers = #tpu.dot_dimension_numbers<[1], [0], [0], [1], [0, 0, 1, 1], [], []>} : vector<32x128xf32>, vector<128x128xf32>, vector<32x128xf32> -> vector<32x128xf32>
    %141 = vector.shape_cast %140 : vector<32x128xf32> to vector<2x16x128xf32>
    %142 = arith.addf %141, %0 : vector<2x16x128xf32>
    %c0_43 = arith.constant 0 : index
    %c0_44 = arith.constant 0 : index
    %c0_45 = arith.constant 0 : index
    %143 = vector.load %arg11[%c0_43, %c0_44, %c0_45] : memref<2x16x128xf32, #tpu.memory_space<vmem>>, vector<2x16x128xf32>
    tpu.vector_store %arg11[%c0_43, %c0_44, %c0_45], %142 {strides = array<i32>} : memref<2x16x128xf32, #tpu.memory_space<vmem>>, vector<2x16x128xf32>,
    return
  }
  func.func @transform_0(%arg0: i32) -> (i32, i32, i32) {
    %c0_i32 = arith.constant 0 : i32
    %c0_i32_0 = arith.constant 0 : i32
    %c0_i32_1 = arith.constant 0 : i32
    return %arg0, %c0_i32, %c0_i32_0 : i32, i32, i32
  }
  func.func @transform_1(%arg0: i32) -> (i32, i32) {
    %c0_i32 = arith.constant 0 : i32
    %c0_i32_0 = arith.constant 0 : i32
    %c0_i32_1 = arith.constant 0 : i32
    return %c0_i32, %c0_i32_0 : i32, i32
  }
  func.func @transform_2(%arg0: i32) -> i32 {
    %c0_i32 = arith.constant 0 : i32
    %c0_i32_0 = arith.constant 0 : i32
    return %c0_i32 : i32
  }
  func.func @transform_3(%arg0: i32) -> (i32, i32) {
    %c0_i32 = arith.constant 0 : i32
    %c0_i32_0 = arith.constant 0 : i32
    %c0_i32_1 = arith.constant 0 : i32
    return %c0_i32, %c0_i32_0 : i32, i32
  }
  func.func @transform_4(%arg0: i32) -> (i32, i32) {
    %c0_i32 = arith.constant 0 : i32
    %c0_i32_0 = arith.constant 0 : i32
    %c0_i32_1 = arith.constant 0 : i32
    return %c0_i32, %c0_i32_0 : i32, i32
  }
  func.func @transform_5(%arg0: i32) -> (i32, i32) {
    %c0_i32 = arith.constant 0 : i32
    %c0_i32_0 = arith.constant 0 : i32
    %c0_i32_1 = arith.constant 0 : i32
    return %c0_i32, %c0_i32_0 : i32, i32
  }
  func.func @transform_6(%arg0: i32) -> i32 {
    %c0_i32 = arith.constant 0 : i32
    %c0_i32_0 = arith.constant 0 : i32
    return %c0_i32 : i32
  }
  func.func @transform_7(%arg0: i32) -> (i32, i32) {
    %c0_i32 = arith.constant 0 : i32
    %c0_i32_0 = arith.constant 0 : i32
    %c0_i32_1 = arith.constant 0 : i32
    return %c0_i32, %c0_i32_0 : i32, i32
  }
  func.func @transform_8(%arg0: i32) -> (i32, i32) {
    %c0_i32 = arith.constant 0 : i32
    %c0_i32_0 = arith.constant 0 : i32
    %c0_i32_1 = arith.constant 0 : i32
    return %c0_i32, %c0_i32_0 : i32, i32
  }
  func.func @transform_9(%arg0: i32) -> (i32, i32) {
    %c0_i32 = arith.constant 0 : i32
    %c0_i32_0 = arith.constant 0 : i32
    %c0_i32_1 = arith.constant 0 : i32
    return %c0_i32, %c0_i32_0 : i32, i32
  }
  func.func @transform_10(%arg0: i32) -> (i32, i32, i32) {
    %c0_i32 = arith.constant 0 : i32
    %c0_i32_0 = arith.constant 0 : i32
    %c0_i32_1 = arith.constant 0 : i32
    return %arg0, %c0_i32, %c0_i32_0 : i32, i32, i32
  }
}

module attributes {stable_mosaic.version = 11 : i64} {
  func.func @temporal_block_kernel(%arg0: i32, %arg1: memref<2x16x128xf32, #tpu.memory_space<vmem>>, %arg2: memref<128x128xf32, #tpu.memory_space<vmem>>, %arg3: memref<1xf32, #tpu.memory_space<smem>>, %arg4: memref<1x128xf32, #tpu.memory_space<vmem>>, %arg5: memref<1x128xf32, #tpu.memory_space<vmem>>, %arg6: memref<3x128xf32, #tpu.memory_space<vmem>>, %arg7: memref<1xf32, #tpu.memory_space<smem>>, %arg8: memref<1x128xf32, #tpu.memory_space<vmem>>, %arg9: memref<1x128xf32, #tpu.memory_space<vmem>>, %arg10: memref<128x128xf32, #tpu.memory_space<vmem>>, %arg11: memref<2x16x128xf32, #tpu.memory_space<vmem>>) attributes {dimension_semantics = [#tpu.dimension_semantics<parallel>], iteration_bounds = array<i64: 1>, scalar_prefetch = 0 : i64, scratch_operands = 0 : i64, tpu.core_type = #tpu.core_type<tc>, window_params = [{transform_indices = @transform_0, window_bounds = array<i64: 2, 16, 128>}, {pipeline_mode = #tpu.pipeline_mode<synchronous>, transform_indices = @transform_1, window_bounds = array<i64: 128, 128>}, {transform_indices = @transform_2, window_bounds = array<i64: 1>}, {pipeline_mode = #tpu.pipeline_mode<synchronous>, transform_indices = @transform_3, window_bounds = array<i64: 1, 128>}, {pipeline_mode = #tpu.pipeline_mode<synchronous>, transform_indices = @transform_4, window_bounds = array<i64: 1, 128>}, {pipeline_mode = #tpu.pipeline_mode<synchronous>, transform_indices = @transform_5, window_bounds = array<i64: 3, 128>}, {transform_indices = @transform_6, window_bounds = array<i64: 1>}, {pipeline_mode = #tpu.pipeline_mode<synchronous>, transform_indices = @transform_7, window_bounds = array<i64: 1, 128>}, {pipeline_mode = #tpu.pipeline_mode<synchronous>, transform_indices = @transform_8, window_bounds = array<i64: 1, 128>}, {pipeline_mode = #tpu.pipeline_mode<synchronous>, transform_indices = @transform_9, window_bounds = array<i64: 128, 128>}, {transform_indices = @transform_10, window_bounds = array<i64: 2, 16, 128>}]} {
    %c0 = arith.constant 0 : index
    %c0_0 = arith.constant 0 : index
    %c0_1 = arith.constant 0 : index
    %0 = vector.load %arg1[%c0, %c0_0, %c0_1] : memref<2x16x128xf32, #tpu.memory_space<vmem>>, vector<2x16x128xf32>
    %1 = vector.shape_cast %0 : vector<2x16x128xf32> to vector<32x128xf32>
    %c0_2 = arith.constant 0 : index
    %c0_3 = arith.constant 0 : index
    %2 = vector.load %arg2[%c0_2, %c0_3] : memref<128x128xf32, #tpu.memory_space<vmem>>, vector<128x128xf32>
    %cst = arith.constant dense<0.000000e+00> : vector<32x128xf32>
    %3 = tpu.matmul %1, %2, %cst {dimension_numbers = #tpu.dot_dimension_numbers<[1], [0], [0], [1], [0, 0, 1, 1], [], []>} : vector<32x128xf32>, vector<128x128xf32>, vector<32x128xf32> -> vector<32x128xf32>
    %c0_4 = arith.constant 0 : index
    %4 = memref.load %arg3[%c0_4] : memref<1xf32, #tpu.memory_space<smem>>
    %cst_5 = arith.constant 0.000000e+00 : f32
    %5 = vector.broadcast %cst_5 : f32 to vector<32x128xf32>
    %6 = arith.cmpf oge, %3, %5 : vector<32x128xf32>
    %7 = vector.broadcast %4 : f32 to vector<32x128xf32>
    %8 = arith.mulf %7, %3 : vector<32x128xf32>
    %9 = arith.select %6, %3, %8 : vector<32x128xi1>, vector<32x128xf32>
    %10 = vector.shape_cast %9 : vector<32x128xf32> to vector<2x16x128xf32>
    %cst_6 = arith.constant dense<0.000000e+00> : vector<2x128xf32>
    %11 = vector.multi_reduction <add>, %10, %cst_6 [1] : vector<2x16x128xf32> to vector<2x128xf32>
    %12 = arith.mulf %10, %10 : vector<2x16x128xf32>
    %cst_7 = arith.constant dense<0.000000e+00> : vector<2x128xf32>
    %13 = vector.multi_reduction <add>, %12, %cst_7 [1] : vector<2x16x128xf32> to vector<2x128xf32>
    %cst_8 = arith.constant dense<0.000000e+00> : vector<2xf32>
    %14 = vector.multi_reduction <add>, %11, %cst_8 [1] : vector<2x128xf32> to vector<2xf32>
    %15 = vector.shape_cast %14 : vector<2xf32> to vector<2x1xf32>
    %cst_9 = arith.constant dense<0.000000e+00> : vector<2xf32>
    %16 = vector.multi_reduction <add>, %13, %cst_9 [1] : vector<2x128xf32> to vector<2xf32>
    %17 = vector.shape_cast %16 : vector<2xf32> to vector<2x1xf32>
    %cst_10 = arith.constant 7.812500e-03 : f32
    %18 = vector.broadcast %cst_10 : f32 to vector<2x1xf32>
    %19 = arith.mulf %15, %18 : vector<2x1xf32>
    %cst_11 = arith.constant 7.812500e-03 : f32
    %20 = vector.broadcast %cst_11 : f32 to vector<2x1xf32>
    %21 = arith.mulf %17, %20 : vector<2x1xf32>
    %22 = arith.mulf %19, %19 : vector<2x1xf32>
    %23 = arith.subf %21, %22 : vector<2x1xf32>
    %cst_12 = arith.constant 0.000000e+00 : f32
    %24 = vector.broadcast %cst_12 : f32 to vector<2x1xf32>
    %25 = arith.maximumf %23, %24 : vector<2x1xf32>
    %cst_13 = arith.constant 9.99999993E-9 : f32
    %26 = vector.broadcast %cst_13 : f32 to vector<2x1xf32>
    %27 = arith.addf %25, %26 : vector<2x1xf32>
    %28 = math.rsqrt %27 : vector<2x1xf32>
    %c0_14 = arith.constant 0 : index
    %c0_15 = arith.constant 0 : index
    %29 = vector.load %arg4[%c0_14, %c0_15] : memref<1x128xf32, #tpu.memory_space<vmem>>, vector<1x128xf32>
    %30 = vector.shape_cast %29 : vector<1x128xf32> to vector<1x1x128xf32>
    %31 = vector.shape_cast %28 : vector<2x1xf32> to vector<2x1x1xf32>
    %32 = vector.broadcast %30 : vector<1x1x128xf32> to vector<2x1x128xf32>
    %33 = vector.broadcast %31 : vector<2x1x1xf32> to vector<2x1x128xf32>
    %34 = arith.mulf %32, %33 : vector<2x1x128xf32>
    %c0_16 = arith.constant 0 : index
    %c0_17 = arith.constant 0 : index
    %35 = vector.load %arg5[%c0_16, %c0_17] : memref<1x128xf32, #tpu.memory_space<vmem>>, vector<1x128xf32>
    %36 = vector.shape_cast %35 : vector<1x128xf32> to vector<1x1x128xf32>
    %37 = vector.shape_cast %19 : vector<2x1xf32> to vector<2x1x1xf32>
    %38 = vector.broadcast %37 : vector<2x1x1xf32> to vector<2x1x128xf32>
    %39 = arith.mulf %38, %34 : vector<2x1x128xf32>
    %40 = vector.broadcast %36 : vector<1x1x128xf32> to vector<2x1x128xf32>
    %41 = arith.subf %40, %39 : vector<2x1x128xf32>
    %42 = vector.broadcast %34 : vector<2x1x128xf32> to vector<2x16x128xf32>
    %43 = arith.mulf %10, %42 : vector<2x16x128xf32>
    %44 = vector.broadcast %41 : vector<2x1x128xf32> to vector<2x16x128xf32>
    %45 = arith.addf %43, %44 : vector<2x16x128xf32>
    %46 = vector.shape_cast %45 : vector<2x16x128xf32> to vector<32x128xf32>
    %c0_18 = arith.constant 0 : index
    %c0_19 = arith.constant 0 : index
    %47 = vector.load %arg6[%c0_18, %c0_19] : memref<3x128xf32, #tpu.memory_space<vmem>>, vector<3x128xf32>
    %48 = tpu.iota {dimensions = array<i32: 0>} : vector<32x1xi32>
    %c16_i32 = arith.constant 16 : i32
    %c0_i32 = arith.constant 0 : i32
    %49 = arith.cmpi eq, %c16_i32, %c0_i32 : i32
    %c1_i32 = arith.constant 1 : i32
    %50 = arith.select %49, %c1_i32, %c16_i32 : i32
    %51 = vector.broadcast %50 : i32 to vector<32x1xi32>
    %52 = arith.remsi %48, %51 : vector<32x1xi32>
    %c0_i32_20 = arith.constant 0 : i32
    %53 = vector.broadcast %c0_i32_20 : i32 to vector<32x1xi32>
    %54 = arith.cmpi ne, %52, %53 : vector<32x1xi32>
    %c0_i32_21 = arith.constant 0 : i32
    %55 = vector.broadcast %c0_i32_21 : i32 to vector<32x1xi32>
    %56 = arith.cmpi slt, %52, %55 : vector<32x1xi32>
    %c0_i32_22 = arith.constant 0 : i32
    %57 = arith.cmpi slt, %50, %c0_i32_22 : i32
    %58 = vector.broadcast %57 : i1 to vector<32x1xi1>
    %59 = vector.broadcast %58 : vector<32x1xi1> to vector<32x1xi1>
    %60 = arith.xori %56, %59 : vector<32x1xi1>
    %61 = arith.andi %60, %54 : vector<32x1xi1>
    %62 = vector.broadcast %50 : i32 to vector<32x1xi32>
    %63 = arith.addi %52, %62 : vector<32x1xi32>
    %64 = arith.select %61, %63, %52 : vector<32x1xi1>, vector<32x1xi32>
    %c2_i32 = arith.constant 2 : i32
    %65 = vector.broadcast %c2_i32 : i32 to vector<32x1xi32>
    %66 = arith.cmpi sge, %64, %65 : vector<32x1xi32>
    %cst_23 = arith.constant 0.000000e+00 : f32
    %67 = vector.broadcast %cst_23 : f32 to vector<2x128xf32>
    %68 = vector.extract_strided_slice %46 {offsets = [0, 0], sizes = [30, 128], strides = [1, 1]} : vector<32x128xf32> to vector<30x128xf32>
    %69 = tpu.concatenate %67, %68 in 0 : vector<2x128xf32>, vector<30x128xf32> -> vector<32x128xf32>
    %cst_24 = arith.constant 0.000000e+00 : f32
    %70 = vector.shape_cast %66 : vector<32x1xi1> to vector<32x1xi1>
    %71 = vector.broadcast %70 : vector<32x1xi1> to vector<32x128xi1>
    %72 = vector.broadcast %cst_24 : f32 to vector<32x128xf32>
    %73 = arith.select %71, %69, %72 : vector<32x128xi1>, vector<32x128xf32>
    %74 = vector.extract_strided_slice %47 {offsets = [0, 0], sizes = [1, 128], strides = [1, 1]} : vector<3x128xf32> to vector<1x128xf32>
    %75 = vector.shape_cast %74 : vector<1x128xf32> to vector<128xf32>
    %76 = vector.shape_cast %75 : vector<128xf32> to vector<1x128xf32>
    %77 = vector.broadcast %76 : vector<1x128xf32> to vector<32x128xf32>
    %78 = arith.mulf %73, %77 : vector<32x128xf32>
    %79 = vector.extract_strided_slice %47 {offsets = [1, 0], sizes = [1, 128], strides = [1, 1]} : vector<3x128xf32> to vector<1x128xf32>
    %80 = vector.shape_cast %79 : vector<1x128xf32> to vector<128xf32>
    %81 = vector.shape_cast %80 : vector<128xf32> to vector<1x128xf32>
    %82 = vector.broadcast %81 : vector<1x128xf32> to vector<32x128xf32>
    %83 = arith.mulf %46, %82 : vector<32x128xf32>
    %84 = arith.addf %78, %83 : vector<32x128xf32>
    %c14_i32 = arith.constant 14 : i32
    %85 = vector.broadcast %c14_i32 : i32 to vector<32x1xi32>
    %86 = arith.cmpi slt, %64, %85 : vector<32x1xi32>
    %87 = vector.extract_strided_slice %46 {offsets = [2, 0], sizes = [30, 128], strides = [1, 1]} : vector<32x128xf32> to vector<30x128xf32>
    %cst_25 = arith.constant 0.000000e+00 : f32
    %88 = vector.broadcast %cst_25 : f32 to vector<2x128xf32>
    %89 = tpu.concatenate %87, %88 in 0 : vector<30x128xf32>, vector<2x128xf32> -> vector<32x128xf32>
    %cst_26 = arith.constant 0.000000e+00 : f32
    %90 = vector.shape_cast %86 : vector<32x1xi1> to vector<32x1xi1>
    %91 = vector.broadcast %90 : vector<32x1xi1> to vector<32x128xi1>
    %92 = vector.broadcast %cst_26 : f32 to vector<32x128xf32>
    %93 = arith.select %91, %89, %92 : vector<32x128xi1>, vector<32x128xf32>
    %94 = vector.extract_strided_slice %47 {offsets = [2, 0], sizes = [1, 128], strides = [1, 1]} : vector<3x128xf32> to vector<1x128xf32>
    %95 = vector.shape_cast %94 : vector<1x128xf32> to vector<128xf32>
    %96 = vector.shape_cast %95 : vector<128xf32> to vector<1x128xf32>
    %97 = vector.broadcast %96 : vector<1x128xf32> to vector<32x128xf32>
    %98 = arith.mulf %93, %97 : vector<32x128xf32>
    %99 = arith.addf %84, %98 : vector<32x128xf32>
    %c0_27 = arith.constant 0 : index
    %100 = memref.load %arg7[%c0_27] : memref<1xf32, #tpu.memory_space<smem>>
    %cst_28 = arith.constant 0.000000e+00 : f32
    %101 = vector.broadcast %cst_28 : f32 to vector<32x128xf32>
    %102 = arith.cmpf oge, %99, %101 : vector<32x128xf32>
    %103 = vector.broadcast %100 : f32 to vector<32x128xf32>
    %104 = arith.mulf %103, %99 : vector<32x128xf32>
    %105 = arith.select %102, %99, %104 : vector<32x128xi1>, vector<32x128xf32>
    %106 = vector.shape_cast %105 : vector<32x128xf32> to vector<2x16x128xf32>
    %cst_29 = arith.constant dense<0.000000e+00> : vector<2x128xf32>
    %107 = vector.multi_reduction <add>, %106, %cst_29 [1] : vector<2x16x128xf32> to vector<2x128xf32>
    %108 = arith.mulf %106, %106 : vector<2x16x128xf32>
    %cst_30 = arith.constant dense<0.000000e+00> : vector<2x128xf32>
    %109 = vector.multi_reduction <add>, %108, %cst_30 [1] : vector<2x16x128xf32> to vector<2x128xf32>
    %cst_31 = arith.constant dense<0.000000e+00> : vector<2xf32>
    %110 = vector.multi_reduction <add>, %107, %cst_31 [1] : vector<2x128xf32> to vector<2xf32>
    %111 = vector.shape_cast %110 : vector<2xf32> to vector<2x1xf32>
    %cst_32 = arith.constant dense<0.000000e+00> : vector<2xf32>
    %112 = vector.multi_reduction <add>, %109, %cst_32 [1] : vector<2x128xf32> to vector<2xf32>
    %113 = vector.shape_cast %112 : vector<2xf32> to vector<2x1xf32>
    %cst_33 = arith.constant 7.812500e-03 : f32
    %114 = vector.broadcast %cst_33 : f32 to vector<2x1xf32>
    %115 = arith.mulf %111, %114 : vector<2x1xf32>
    %cst_34 = arith.constant 7.812500e-03 : f32
    %116 = vector.broadcast %cst_34 : f32 to vector<2x1xf32>
    %117 = arith.mulf %113, %116 : vector<2x1xf32>
    %118 = arith.mulf %115, %115 : vector<2x1xf32>
    %119 = arith.subf %117, %118 : vector<2x1xf32>
    %cst_35 = arith.constant 0.000000e+00 : f32
    %120 = vector.broadcast %cst_35 : f32 to vector<2x1xf32>
    %121 = arith.maximumf %119, %120 : vector<2x1xf32>
    %cst_36 = arith.constant 9.99999993E-9 : f32
    %122 = vector.broadcast %cst_36 : f32 to vector<2x1xf32>
    %123 = arith.addf %121, %122 : vector<2x1xf32>
    %124 = math.rsqrt %123 : vector<2x1xf32>
    %c0_37 = arith.constant 0 : index
    %c0_38 = arith.constant 0 : index
    %125 = vector.load %arg8[%c0_37, %c0_38] : memref<1x128xf32, #tpu.memory_space<vmem>>, vector<1x128xf32>
    %126 = vector.shape_cast %125 : vector<1x128xf32> to vector<1x1x128xf32>
    %127 = vector.shape_cast %124 : vector<2x1xf32> to vector<2x1x1xf32>
    %128 = vector.broadcast %126 : vector<1x1x128xf32> to vector<2x1x128xf32>
    %129 = vector.broadcast %127 : vector<2x1x1xf32> to vector<2x1x128xf32>
    %130 = arith.mulf %128, %129 : vector<2x1x128xf32>
    %c0_39 = arith.constant 0 : index
    %c0_40 = arith.constant 0 : index
    %131 = vector.load %arg9[%c0_39, %c0_40] : memref<1x128xf32, #tpu.memory_space<vmem>>, vector<1x128xf32>
    %132 = vector.shape_cast %131 : vector<1x128xf32> to vector<1x1x128xf32>
    %133 = vector.shape_cast %115 : vector<2x1xf32> to vector<2x1x1xf32>
    %134 = vector.broadcast %133 : vector<2x1x1xf32> to vector<2x1x128xf32>
    %135 = arith.mulf %134, %130 : vector<2x1x128xf32>
    %136 = vector.broadcast %132 : vector<1x1x128xf32> to vector<2x1x128xf32>
    %137 = arith.subf %136, %135 : vector<2x1x128xf32>
    %138 = vector.broadcast %130 : vector<2x1x128xf32> to vector<2x16x128xf32>
    %139 = arith.mulf %106, %138 : vector<2x16x128xf32>
    %140 = vector.broadcast %137 : vector<2x1x128xf32> to vector<2x16x128xf32>
    %141 = arith.addf %139, %140 : vector<2x16x128xf32>
    %142 = vector.shape_cast %141 : vector<2x16x128xf32> to vector<32x128xf32>
    %c0_41 = arith.constant 0 : index
    %c0_42 = arith.constant 0 : index
    %143 = vector.load %arg10[%c0_41, %c0_42] : memref<128x128xf32, #tpu.memory_space<vmem>>, vector<128x128xf32>
    %cst_43 = arith.constant dense<0.000000e+00> : vector<32x128xf32>
    %144 = tpu.matmul %142, %143, %cst_43 {dimension_numbers = #tpu.dot_dimension_numbers<[1], [0], [0], [1], [0, 0, 1, 1], [], []>} : vector<32x128xf32>, vector<128x128xf32>, vector<32x128xf32> -> vector<32x128xf32>
    %145 = vector.shape_cast %144 : vector<32x128xf32> to vector<2x16x128xf32>
    %146 = arith.addf %145, %0 : vector<2x16x128xf32>
    %c0_44 = arith.constant 0 : index
    %c0_45 = arith.constant 0 : index
    %c0_46 = arith.constant 0 : index
    %147 = vector.load %arg11[%c0_44, %c0_45, %c0_46] : memref<2x16x128xf32, #tpu.memory_space<vmem>>, vector<2x16x128xf32>
    tpu.vector_store %arg11[%c0_44, %c0_45, %c0_46], %146 {strides = array<i32>} : memref<2x16x128xf32, #tpu.memory_space<vmem>>, vector<2x16x128xf32>,
    return
  }
  func.func @transform_0(%arg0: i32) -> (i32, i32, i32) {
    %c0_i32 = arith.constant 0 : i32
    %c0_i32_0 = arith.constant 0 : i32
    %c0_i32_1 = arith.constant 0 : i32
    return %arg0, %c0_i32, %c0_i32_0 : i32, i32, i32
  }
  func.func @transform_1(%arg0: i32) -> (i32, i32) {
    %c0_i32 = arith.constant 0 : i32
    %c0_i32_0 = arith.constant 0 : i32
    %c0_i32_1 = arith.constant 0 : i32
    return %c0_i32, %c0_i32_0 : i32, i32
  }
  func.func @transform_2(%arg0: i32) -> i32 {
    %c0_i32 = arith.constant 0 : i32
    %c0_i32_0 = arith.constant 0 : i32
    return %c0_i32 : i32
  }
  func.func @transform_3(%arg0: i32) -> (i32, i32) {
    %c0_i32 = arith.constant 0 : i32
    %c0_i32_0 = arith.constant 0 : i32
    %c0_i32_1 = arith.constant 0 : i32
    return %c0_i32, %c0_i32_0 : i32, i32
  }
  func.func @transform_4(%arg0: i32) -> (i32, i32) {
    %c0_i32 = arith.constant 0 : i32
    %c0_i32_0 = arith.constant 0 : i32
    %c0_i32_1 = arith.constant 0 : i32
    return %c0_i32, %c0_i32_0 : i32, i32
  }
  func.func @transform_5(%arg0: i32) -> (i32, i32) {
    %c0_i32 = arith.constant 0 : i32
    %c0_i32_0 = arith.constant 0 : i32
    %c0_i32_1 = arith.constant 0 : i32
    return %c0_i32, %c0_i32_0 : i32, i32
  }
  func.func @transform_6(%arg0: i32) -> i32 {
    %c0_i32 = arith.constant 0 : i32
    %c0_i32_0 = arith.constant 0 : i32
    return %c0_i32 : i32
  }
  func.func @transform_7(%arg0: i32) -> (i32, i32) {
    %c0_i32 = arith.constant 0 : i32
    %c0_i32_0 = arith.constant 0 : i32
    %c0_i32_1 = arith.constant 0 : i32
    return %c0_i32, %c0_i32_0 : i32, i32
  }
  func.func @transform_8(%arg0: i32) -> (i32, i32) {
    %c0_i32 = arith.constant 0 : i32
    %c0_i32_0 = arith.constant 0 : i32
    %c0_i32_1 = arith.constant 0 : i32
    return %c0_i32, %c0_i32_0 : i32, i32
  }
  func.func @transform_9(%arg0: i32) -> (i32, i32) {
    %c0_i32 = arith.constant 0 : i32
    %c0_i32_0 = arith.constant 0 : i32
    %c0_i32_1 = arith.constant 0 : i32
    return %c0_i32, %c0_i32_0 : i32, i32
  }
  func.func @transform_10(%arg0: i32) -> (i32, i32, i32) {
    %c0_i32 = arith.constant 0 : i32
    %c0_i32_0 = arith.constant 0 : i32
    %c0_i32_1 = arith.constant 0 : i32
    return %arg0, %c0_i32, %c0_i32_0 : i32, i32, i32
  }
}

</mosaic_0001>

<llo_original>
// kernel: tpu_custom_call.1
$region0: #{tpu_custom_call.1}
  #allocation0 [shape = 'u32[]', space=smem, size = 0x4, offset = 0x4, fixed_abs, tag = 'smem constant byte address 0x4 - core index']
  #allocation1 [shape = 'u32[144,128]{1,0:T(1,128)}', space=vmem, size = 0x12000, scoped, tag = 'internal scratch']
  #allocation2 [shape = 'f32[1]{0:T(128)S(6)}', space=smem, size = 0x200, scoped, tag = 'scoped memory for tpu_custom_call.1']
  #allocation3 [shape = 'f32[1]{0:T(128)S(6)}', space=smem, size = 0x200, scoped, tag = 'scoped memory for tpu_custom_call.1']
  %s0 = inlined_call_operand.hbm [shape: f32[2,16,128], index: 0, kind: input, shape index: {}]
  %s1 = inlined_call_operand.hbm [shape: f32[128,128], index: 1, kind: input, shape index: {}]
  %s2 = inlined_call_operand.<no memory space> [shape: f32[1], index: 2, kind: input, shape index: {}]
  %s3 = inlined_call_operand.vmem [shape: f32[1,128], index: 3, kind: input, shape index: {}]
  %s4 = inlined_call_operand.vmem [shape: f32[1,128], index: 4, kind: input, shape index: {}]
  %s5 = inlined_call_operand.vmem [shape: f32[3,128], index: 5, kind: input, shape index: {}]
  %s6 = inlined_call_operand.<no memory space> [shape: f32[1], index: 6, kind: input, shape index: {}]
  %s7 = inlined_call_operand.vmem [shape: f32[1,128], index: 7, kind: input, shape index: {}]
  %s8 = inlined_call_operand.vmem [shape: f32[1,128], index: 8, kind: input, shape index: {}]
  %s9 = inlined_call_operand.hbm [shape: f32[128,128], index: 9, kind: input, shape index: {}]
  %s10 = inlined_call_operand.hbm [shape: f32[2,16,128], index: 10, kind: output, shape index: {}]
  %s11 = sld [smem:[#allocation0]]
  $region62: #{tpu_custom_call.1} parent=0
    _
  %s13 = ssub.s32 1, %s11
  %s14 = scalar_select 0, %s13, %s11
  %15 = sst [smem:[#allocation2]] %s2
  %16 = sst [smem:[#allocation3]] %s6
  $region1: #{tpu_custom_call.1} parent=0
    #allocation4 [shape = 'u8[16384]{0}', space=vmem, size = 0x4000, scoped, tag = 'input window, operand 0, single buffered']
    #allocation5 [shape = 's32[1]{0}', space=sflag, size = 0x4, scoped, tag = 'scoped memory for tpu_custom_call.1']
    #allocation6 [shape = 's32[1]{0}', space=sflag, size = 0x4, scoped, tag = 'scoped memory for tpu_custom_call.1']
    #allocation7 [shape = 'u8[65536]{0}', space=vmem, size = 0x10000, scoped, tag = 'input window, operand 1, single buffered']
    #allocation8 [shape = 's32[1]{0}', space=sflag, size = 0x4, scoped, tag = 'scoped memory for tpu_custom_call.1']
    #allocation9 [shape = 'u8[65536]{0}', space=vmem, size = 0x10000, scoped, tag = 'input window, operand 9, single buffered']
    #allocation10 [shape = 'u8[16384]{0}', space=vmem, size = 0x4000, scoped, tag = 'output window, operand 0, single buffered']
    %17 = vsyncpa [#allocation5], 0
    %18 = vsyncpa [#allocation8], 0
    %19 = vsyncpa [#allocation6], 0
    // Predicated region
    $region2: #{tpu_custom_call.1} parent=1 // pred_check
      _
    $region3: #{tpu_custom_call.1} parent=1 // pred_check_branch
      %21 = sbr.rel (0) target = $region5
    $region4: #{tpu_custom_call.1} parent=1 // pred_region
      %s23 = ssub.s32 512, 512
      %24 = vsyncadd [#allocation5], %s23
      %s25 = sshll.u32 [#allocation4], 4
      %s26 = int_to_ptr.vmem [resolvable:$true] %s25
      %31 = dma.hbm_to_vmem [thread:$0]  %s0, 512, %s26, [#allocation5], 128, 128, 8
    $region5: #{tpu_custom_call.1} parent=1 // pred_fallthru
      _
    // Predicated region
    $region6: #{tpu_custom_call.1} parent=1 // pred_check
      _
    $region7: #{tpu_custom_call.1} parent=1 // pred_check_branch
      %33 = sbr.rel (0) target = $region9
    $region8: #{tpu_custom_call.1} parent=1 // pred_region
      %s35 = ssub.s32 2048, 2048
      %36 = vsyncadd [#allocation8], %s35
      %s37 = sshll.u32 [#allocation7], 4
      %s38 = int_to_ptr.vmem [resolvable:$true] %s37
      %43 = dma.hbm_to_vmem [thread:$0]  %s1, 2048, %s38, [#allocation8], 128, 128, 8
    $region9: #{tpu_custom_call.1} parent=1 // pred_fallthru
      _
    // Predicated region
    $region10: #{tpu_custom_call.1} parent=1 // pred_check
      _
    $region11: #{tpu_custom_call.1} parent=1 // pred_check_branch
      %45 = sbr.rel (0) target = $region13
    $region12: #{tpu_custom_call.1} parent=1 // pred_region
      _
    $region13: #{tpu_custom_call.1} parent=1 // pred_fallthru
      _
    // Predicated region
    $region14: #{tpu_custom_call.1} parent=1 // pred_check
      _
    $region15: #{tpu_custom_call.1} parent=1 // pred_check_branch
      %47 = sbr.rel (0) target = $region17
    $region16: #{tpu_custom_call.1} parent=1 // pred_region
      _
    $region17: #{tpu_custom_call.1} parent=1 // pred_fallthru
      _
    // Predicated region
    $region18: #{tpu_custom_call.1} parent=1 // pred_check
      _
    $region19: #{tpu_custom_call.1} parent=1 // pred_check_branch
      %49 = sbr.rel (0) target = $region21
    $region20: #{tpu_custom_call.1} parent=1 // pred_region
      _
    $region21: #{tpu_custom_call.1} parent=1 // pred_fallthru
      _
    // Predicated region
    $region22: #{tpu_custom_call.1} parent=1 // pred_check
      _
    $region23: #{tpu_custom_call.1} parent=1 // pred_check_branch
      %51 = sbr.rel (0) target = $region25
    $region24: #{tpu_custom_call.1} parent=1 // pred_region
      _
    $region25: #{tpu_custom_call.1} parent=1 // pred_fallthru
      _
    // Predicated region
    $region26: #{tpu_custom_call.1} parent=1 // pred_check
      _
    $region27: #{tpu_custom_call.1} parent=1 // pred_check_branch
      %53 = sbr.rel (0) target = $region29
    $region28: #{tpu_custom_call.1} parent=1 // pred_region
      _
    $region29: #{tpu_custom_call.1} parent=1 // pred_fallthru
      _
    // Predicated region
    $region30: #{tpu_custom_call.1} parent=1 // pred_check
      _
    $region31: #{tpu_custom_call.1} parent=1 // pred_check_branch
      %55 = sbr.rel (0) target = $region33
    $region32: #{tpu_custom_call.1} parent=1 // pred_region
      _
    $region33: #{tpu_custom_call.1} parent=1 // pred_fallthru
      _
    // Predicated region
    $region34: #{tpu_custom_call.1} parent=1 // pred_check
      _
    $region35: #{tpu_custom_call.1} parent=1 // pred_check_branch
      %57 = sbr.rel (0) target = $region37
    $region36: #{tpu_custom_call.1} parent=1 // pred_region
      _
    $region37: #{tpu_custom_call.1} parent=1 // pred_fallthru
      _
    // Predicated region
    $region38: #{tpu_custom_call.1} parent=1 // pred_check
      _
    $region39: #{tpu_custom_call.1} parent=1 // pred_check_branch
      %59 = sbr.rel (0) target = $region41
    $region40: #{tpu_custom_call.1} parent=1 // pred_region
      %s61 = ssub.s32 2048, 2048
      %62 = vsyncadd [#allocation8], %s61
      %s63 = sshll.u32 [#allocation9], 4
      %s64 = int_to_ptr.vmem [resolvable:$true] %s63
      %69 = dma.hbm_to_vmem [thread:$0]  %s9, 2048, %s64, [#allocation8], 128, 128, 8
    $region41: #{tpu_custom_call.1} parent=1 // pred_fallthru
      _
    // Predicated region
    $region42: #{tpu_custom_call.1} parent=1 // pred_check
      _
    $region43: #{tpu_custom_call.1} parent=1 // pred_check_branch
      %71 = sbr.rel (0) target = $region45
    $region44: #{tpu_custom_call.1} parent=1 // pred_region
      %72 = dma.done [#allocation5], 512
    $region45: #{tpu_custom_call.1} parent=1 // pred_fallthru
      _
    // Predicated region
    $region46: #{tpu_custom_call.1} parent=1 // pred_check
      _
    $region47: #{tpu_custom_call.1} parent=1 // pred_check_branch
      %74 = sbr.rel (0) target = $region49
    $region48: #{tpu_custom_call.1} parent=1 // pred_region
      %75 = dma.done [#allocation8], 2048
    $region49: #{tpu_custom_call.1} parent=1 // pred_fallthru
      _
    // Predicated region
    $region50: #{tpu_custom_call.1} parent=1 // pred_check
      _
    $region51: #{tpu_custom_call.1} parent=1 // pred_check_branch
      %77 = sbr.rel (0) target = $region53
    $region52: #{tpu_custom_call.1} parent=1 // pred_region
      %78 = dma.done [#allocation8], 2048
    $region53: #{tpu_custom_call.1} parent=1 // pred_fallthru
      _
    %v79 = vld [vmem:[#allocation4] sm:$0xff]
    %v80 = vld [vmem:[#allocation4 + $0x8] sm:$0xff]
    %v81 = vld [vmem:[#allocation4 + $0x10] sm:$0xff]
    %v82 = vld [vmem:[#allocation4 + $0x18] sm:$0xff]
    %v83 = vld [vmem:[#allocation7] sm:$0xff]
    %v84 = vld [vmem:[#allocation7 + $0x8] sm:$0xff]
    %v85 = vld [vmem:[#allocation7 + $0x10] sm:$0xff]
    %v86 = vld [vmem:[#allocation7 + $0x18] sm:$0xff]
    %v87 = vld [vmem:[#allocation7 + $0x20] sm:$0xff]
    %v88 = vld [vmem:[#allocation7 + $0x28] sm:$0xff]
    %v89 = vld [vmem:[#allocation7 + $0x30] sm:$0xff]
    %v90 = vld [vmem:[#allocation7 + $0x38] sm:$0xff]
    %v91 = vld [vmem:[#allocation7 + $0x40] sm:$0xff]
    %v92 = vld [vmem:[#allocation7 + $0x48] sm:$0xff]
    %v93 = vld [vmem:[#allocation7 + $0x50] sm:$0xff]
    %v94 = vld [vmem:[#allocation7 + $0x58] sm:$0xff]
    %v95 = vld [vmem:[#allocation7 + $0x60] sm:$0xff]
    %v96 = vld [vmem:[#allocation7 + $0x68] sm:$0xff]
    %v97 = vld [vmem:[#allocation7 + $0x70] sm:$0xff]
    %v98 = vld [vmem:[#allocation7 + $0x78] sm:$0xff]
    %99 = vmatprep.subr.mxu0 0.0
    %100 = vmatpush1.msra.mxu0 %v83
    %101 = vmatprep.subr.mxu0 0.0
    %102 = vmatpush1.msra.mxu0 %v84
    %103 = vmatprep.subr.mxu0 0.0
    %104 = vmatpush1.msra.mxu0 %v85
    %105 = vmatprep.subr.mxu0 0.0
    %106 = vmatpush1.msra.mxu0 %v86
    %107 = vmatprep.subr.mxu0 0.0
    %108 = vmatpush1.msra.mxu0 %v87
    %109 = vmatprep.subr.mxu0 0.0
    %110 = vmatpush1.msra.mxu0 %v88
    %111 = vmatprep.subr.mxu0 0.0
    %112 = vmatpush1.msra.mxu0 %v89
    %113 = vmatprep.subr.mxu0 0.0
    %114 = vmatpush1.msra.mxu0 %v90
    %115 = vmatprep.subr.mxu0 0.0
    %116 = vmatpush1.msra.mxu0 %v91
    %117 = vmatprep.subr.mxu0 0.0
    %118 = vmatpush1.msra.mxu0 %v92
    %119 = vmatprep.subr.mxu0 0.0
    %120 = vmatpush1.msra.mxu0 %v93
    %121 = vmatprep.subr.mxu0 0.0
    %122 = vmatpush1.msra.mxu0 %v94
    %123 = vmatprep.subr.mxu0 0.0
    %124 = vmatpush1.msra.mxu0 %v95
    %125 = vmatprep.subr.mxu0 0.0
    %126 = vmatpush1.msra.mxu0 %v96
    %127 = vmatprep.subr.mxu0 0.0
    %128 = vmatpush1.msra.mxu0 %v97
    %129 = vmatprep.subr.mxu0 0.0
    %130 = vmatpush1.msra.mxu0 %v98
    %131 = vmatprep.subr.mxu0 0.0
    %132 = vmatpush1.msra.mxu0 0.0
    %133 = vmatprep.subr.mxu0 0.0
    %134 = vmatpush1.msra.mxu0 0.0
    %135 = vmatprep.subr.mxu0 0.0
    %136 = vmatpush1.msra.mxu0 0.0
    %137 = vmatprep.subr.mxu0 0.0
    %138 = vmatpush1.msra.mxu0 0.0
    %139 = vmatprep.subr.mxu0 0.0
    %140 = vmatpush1.msra.mxu0 0.0
    %141 = vmatprep.subr.mxu0 0.0
    %142 = vmatpush1.msra.mxu0 0.0
    %143 = vmatprep.subr.mxu0 0.0
    %144 = vmatpush1.msra.mxu0 0.0
    %145 = vmatprep.subr.mxu0 0.0
    %146 = vmatpush1.msra.mxu0 0.0
    %147 = vmatprep.subr.mxu0 0.0
    %148 = vmatpush1.msra.mxu0 0.0
    %149 = vmatprep.subr.mxu0 0.0
    %150 = vmatpush1.msra.mxu0 0.0
    %151 = vmatprep.subr.mxu0 0.0
    %152 = vmatpush1.msra.mxu0 0.0
    %153 = vmatprep.subr.mxu0 0.0
    %154 = vmatpush1.msra.mxu0 0.0
    %155 = vmatprep.subr.mxu0 0.0
    %156 = vmatpush1.msra.mxu0 0.0
    %157 = vmatprep.subr.mxu0 0.0
    %158 = vmatpush1.msra.mxu0 0.0
    %159 = vmatprep.subr.mxu0 0.0
    %160 = vmatpush1.msra.mxu0 0.0
    %161 = vmatprep.subr.mxu0 0.0
    %162 = vmatpush1.msra.mxu0 0.0
    %163 = vmatprep.mubr.f32.mxu0 0.0
    %164 = vmatmul.mubr.f32.gmra.mrb[0].mxu0 %v79
    %v165 = vpop.f32.mrb[0].mxu0
    %v166 = vadd.f32 0.0, %v165
    %v167 = vpop.f32.mrb[0].mxu0
    %168 = vmatprep.mubr.f32.mxu0 0.0
    %169 = vmatmul.mubr.f32.gmra.mrb[0].mxu0 %v80
    %v170 = vpop.f32.mrb[0].mxu0
    %v171 = vadd.f32 0.0, %v170
    %v172 = vpop.f32.mrb[0].mxu0
    %173 = vmatprep.mubr.f32.mxu0 0.0
    %174 = vmatmul.mubr.f32.gmra.mrb[0].mxu0 %v81
    %v175 = vpop.f32.mrb[0].mxu0
    %v176 = vadd.f32 0.0, %v175
    %v177 = vpop.f32.mrb[0].mxu0
    %178 = vmatprep.mubr.f32.mxu0 0.0
    %179 = vmatmul.mubr.f32.gmra.mrb[0].mxu0 %v82
    %v180 = vpop.f32.mrb[0].mxu0
    %v181 = vadd.f32 0.0, %v180
    %v182 = vpop.f32.mrb[0].mxu0
    %183 = vdwg.mxu0
    %s184 = sld [smem:[#allocation2]]
    %vm185 = vcmp.ge.f32.partialorder %v166, 0.0
    %vm186 = vcmp.ge.f32.partialorder %v171, 0.0
    %vm187 = vcmp.ge.f32.partialorder %v176, 0.0
    %vm188 = vcmp.ge.f32.partialorder %v181, 0.0
    %v189 = vstv %s184
    %v190 = vmul.f32 %v189, %v166
    %v191 = vmul.f32 %v189, %v171
    %v192 = vmul.f32 %v189, %v176
    %v193 = vmul.f32 %v189, %v181
    %v194 = vsel %vm185, %v166, %v190
    %v195 = vsel %vm186, %v171, %v191
    %v196 = vsel %vm187, %v176, %v192
    %v197 = vsel %vm188, %v181, %v193
    %v198 = vadd.f32 %v194, %v195
    %v199 = vrot.slane %v198, 4
    %v200 = vadd.f32 %v198, %v199
    %v201 = vrot.slane %v200, 2
    %v202 = vadd.f32 %v200, %v201
    %v203 = vrot.slane %v202, 1
    %v204 = vadd.f32 %v202, %v203
    %v205 = vadd.f32 %v196, %v197
    %v206 = vrot.slane %v205, 4
    %v207 = vadd.f32 %v205, %v206
    %v208 = vrot.slane %v207, 2
    %v209 = vadd.f32 %v207, %v208
    %v210 = vrot.slane %v209, 1
    %v211 = vadd.f32 %v209, %v210
    %v212 = vmul.f32 %v194, %v194
    %v213 = vmul.f32 %v195, %v195
    %v214 = vmul.f32 %v196, %v196
    %v215 = vmul.f32 %v197, %v197
    %v216 = vadd.f32 %v212, %v213
    %v217 = vrot.slane %v216, 4
    %v218 = vadd.f32 %v216, %v217
    %v219 = vrot.slane %v218, 2
    %v220 = vadd.f32 %v218, %v219
    %v221 = vrot.slane %v220, 1
    %v222 = vadd.f32 %v220, %v221
    %v223 = vadd.f32 %v214, %v215
    %v224 = vrot.slane %v223, 4
    %v225 = vadd.f32 %v223, %v224
    %v226 = vrot.slane %v225, 2
    %v227 = vadd.f32 %v225, %v226
    %v228 = vrot.slane %v227, 1
    %v229 = vadd.f32 %v227, %v228
    %vm232 = vcmask 1041409
    %v233 = vsel %vm232, %v211, %v204
    %vm235 = vcmask 1041408
    %v236 = vsel %vm235, %v233, 0.0
    %237 = vadd.xlane.f32.xlu0 %v236
    %v238 = vpop.xlane.xlu0 %237
    %v241 = vsel %vm232, %v229, %v222
    %v243 = vsel %vm235, %v241, 0.0
    %244 = vadd.xlane.f32.xlu0 %v243
    %v245 = vpop.xlane.xlu0 %244
    %v246 = vmul.f32 %v238, 0.0078125
    %v247 = vmul.f32 %v245, 0.0078125
    %v248 = vmul.f32 %v246, %v246
    %v249 = vsub.f32 %v247, %v248
    %v250 = vmax.f32 %v249, 0.0
    %v251 = vadd.f32 %v250, 1e-08
    %v252 = vrsqrt.pop %v251
    %v253 = vld [vmem:[%s3] sm:$0x1]
    %v255 = vlaneseq
    %v256 = vshrl.u32 %v255, 7
    %v257 = vsub.s32 0, %v256
    %v258 = vrot.slane %v252, %v257
    %v259 = vlaneseq
    %v260 = vshrl.u32 %v259, 7
    %v261 = vsub.s32 1, %v260
    %v262 = vrot.slane %v252, %v261
    %v265 = vmul.f32 %v253, %v258
    %v266 = vmul.f32 %v253, %v262
    %v267 = vld [vmem:[%s4] sm:$0x1]
    %v269 = vlaneseq
    %v270 = vshrl.u32 %v269, 7
    %v271 = vsub.s32 0, %v270
    %v272 = vrot.slane %v246, %v271
    %v273 = vlaneseq
    %v274 = vshrl.u32 %v273, 7
    %v275 = vsub.s32 1, %v274
    %v276 = vrot.slane %v246, %v275
    %v279 = vmul.f32 %v272, %v265
    %v280 = vmul.f32 %v276, %v266
    %v281 = vsub.f32 %v267, %v279
    %v282 = vsub.f32 %v267, %v280
    %v285 = vlaneseq
    %v286 = vshrl.u32 %v285, 7
    %v287 = vsub.s32 0, %v286
    %v288 = vrot.slane %v265, %v287
    %v289 = vlaneseq
    %v290 = vshrl.u32 %v289, 7
    %v291 = vsub.s32 0, %v290
    %v292 = vrot.slane %v266, %v291
    %v295 = vmul.f32 %v194, %v288
    %v296 = vmul.f32 %v195, %v288
    %v297 = vmul.f32 %v196, %v292
    %v298 = vmul.f32 %v197, %v292
    %v301 = vlaneseq
    %v302 = vshrl.u32 %v301, 7
    %v303 = vsub.s32 0, %v302
    %v304 = vrot.slane %v281, %v303
    %v305 = vlaneseq
    %v306 = vshrl.u32 %v305, 7
    %v307 = vsub.s32 0, %v306
    %v308 = vrot.slane %v282, %v307
    %v311 = vadd.f32 %v295, %v304
    %v312 = vadd.f32 %v296, %v304
    %v313 = vadd.f32 %v297, %v308
    %v314 = vadd.f32 %v298, %v308
    %v315 = vld [vmem:[%s5] sm:$0x7]
    %v316 = vlaneseq
    %v317 = vshrl.u32 %v316, 7
    %v318 = vadd.s32 %v317, 8
    %v319 = vadd.s32 %v317, 16
    %v320 = vadd.s32 %v317, 24
    %vm321 = vcmp.lt.s32.totalorder %v317, 0
    %v322 = vsub.s32 0, %v317
    %v323 = vsel %vm321, %v322, %v317
    %v324 = vshrl.u32 %v323, 4
    %v325 = vand.u32 %v323, 15
    %v326 = vsub.s32 0, %v325
    %v327 = vsel %vm321, %v326, %v325
    %vm328 = vcmp.lt.s32.totalorder %v318, 0
    %v329 = vsub.s32 0, %v318
    %v330 = vsel %vm328, %v329, %v318
    %v331 = vshrl.u32 %v330, 4
    %v332 = vand.u32 %v330, 15
    %v333 = vsub.s32 0, %v332
    %v334 = vsel %vm328, %v333, %v332
    %vm335 = vcmp.lt.s32.totalorder %v319, 0
    %v336 = vsub.s32 0, %v319
    %v337 = vsel %vm335, %v336, %v319
    %v338 = vshrl.u32 %v337, 4
    %v339 = vand.u32 %v337, 15
    %v340 = vsub.s32 0, %v339
    %v341 = vsel %vm335, %v340, %v339
    %vm342 = vcmp.lt.s32.totalorder %v320, 0
    %v343 = vsub.s32 0, %v320
    %v344 = vsel %vm342, %v343, %v320
    %v345 = vshrl.u32 %v344, 4
    %v346 = vand.u32 %v344, 15
    %v347 = vsub.s32 0, %v346
    %v348 = vsel %vm342, %v347, %v346
    %vm349 = vcmp.ne.s32.totalorder %v327, 0
    %vm350 = vcmp.ne.s32.totalorder %v334, 0
    %vm351 = vcmp.ne.s32.totalorder %v341, 0
    %vm352 = vcmp.ne.s32.totalorder %v348, 0
    %vm353 = vcmp.lt.s32.totalorder %v327, 0
    %vm354 = vcmp.lt.s32.totalorder %v334, 0
    %vm355 = vcmp.lt.s32.totalorder %v341, 0
    %vm356 = vcmp.lt.s32.totalorder %v348, 0
    %vm357 = vmand %vm353, %vm349
    %vm358 = vmand %vm354, %vm350
    %vm359 = vmand %vm355, %vm351
    %vm360 = vmand %vm356, %vm352
    %v361 = vadd.s32 %v327, 16
    %v362 = vadd.s32 %v334, 16
    %v363 = vadd.s32 %v341, 16
    %v364 = vadd.s32 %v348, 16
    %v365 = vsel %vm357, %v361, %v327
    %v366 = vsel %vm358, %v362, %v334
    %v367 = vsel %vm359, %v363, %v341
    %v368 = vsel %vm360, %v364, %v348
    %vm369 = vcmp.ge.s32.totalorder %v365, 2
    %vm370 = vcmp.ge.s32.totalorder %v366, 2
    %vm371 = vcmp.ge.s32.totalorder %v367, 2
    %vm372 = vcmp.ge.s32.totalorder %v368, 2
    %v373 = vrot.slane %v311, 6
    %v374 = vrot.slane %v312, 6
    %v375 = vrot.slane %v313, 6
    %v376 = vrot.slane %v314, 6
    %vm377 = vcmp.lt.s32.totalorder %v317, 2
    %v378 = vsel %vm377, %v375, %v376
    %v379 = vsel %vm377, %v374, %v375
    %v380 = vsel %vm377, %v373, %v374
    %v381 = vsel %vm377, %v376, %v373
    %v382 = vsel %vm369, 1, 0
    %v383 = vsel %vm370, 1, 0
    %v384 = vsel %vm371, 1, 0
    %v385 = vsel %vm372, 1, 0
    %vm386 = vcmp.eq.s32.totalorder %v382, 1
    %vm387 = vcmp.eq.s32.totalorder %v383, 1
    %vm388 = vcmp.eq.s32.totalorder %v384, 1
    %vm389 = vcmp.eq.s32.totalorder %v385, 1
    %v390 = vsel %vm386, %v381, 0.0
    %v391 = vsel %vm387, %v380, 0.0
    %v392 = vsel %vm388, %v379, 0.0
    %v393 = vsel %vm389, %v378, 0.0
    %v394 = vlaneseq
    %v395 = vshrl.u32 %v394, 7
    %v396 = vsub.s32 0, %v395
    %v397 = vrot.slane %v315, %v396
    %v398 = vmul.f32 %v390, %v397
    %v399 = vmul.f32 %v391, %v397
    %v400 = vmul.f32 %v392, %v397
    %v401 = vmul.f32 %v393, %v397
    %v402 = vlaneseq
    %v403 = vshrl.u32 %v402, 7
    %v404 = vsub.s32 1, %v403
    %v405 = vrot.slane %v315, %v404
    %v406 = vmul.f32 %v311, %v405
    %v407 = vmul.f32 %v312, %v405
    %v408 = vmul.f32 %v313, %v405
    %v409 = vmul.f32 %v314, %v405
    %v410 = vadd.f32 %v398, %v406
    %v411 = vadd.f32 %v399, %v407
    %v412 = vadd.f32 %v400, %v408
    %v413 = vadd.f32 %v401, %v409
    %vm414 = vcmp.lt.s32.totalorder %v365, 14
    %vm415 = vcmp.lt.s32.totalorder %v366, 14
    %vm416 = vcmp.lt.s32.totalorder %v367, 14
    %vm417 = vcmp.lt.s32.totalorder %v368, 14
    %v418 = vrot.slane %v311, 2
    %v419 = vrot.slane %v312, 2
    %v420 = vrot.slane %v313, 2
    %v421 = vrot.slane %v314, 2
    %vm422 = vcmp.lt.s32.totalorder %v317, 6
    %v423 = vsel %vm422, %v420, %v421
    %v424 = vsel %vm422, %v419, %v420
    %v425 = vsel %vm422, %v418, %v419
    %v426 = vsel %vm422, %v421, %v418
    %v427 = vsel %vm414, 1, 0
    %v428 = vsel %vm415, 1, 0
    %v429 = vsel %vm416, 1, 0
    %v430 = vsel %vm417, 1, 0
    %vm431 = vcmp.eq.s32.totalorder %v427, 1
    %vm432 = vcmp.eq.s32.totalorder %v428, 1
    %vm433 = vcmp.eq.s32.totalorder %v429, 1
    %vm434 = vcmp.eq.s32.totalorder %v430, 1
    %v435 = vsel %vm431, %v425, 0.0
    %v436 = vsel %vm432, %v424, 0.0
    %v437 = vsel %vm433, %v423, 0.0
    %v438 = vsel %vm434, %v426, 0.0
    %v439 = vlaneseq
    %v440 = vshrl.u32 %v439, 7
    %v441 = vsub.s32 2, %v440
    %v442 = vrot.slane %v315, %v441
    %v443 = vmul.f32 %v435, %v442
    %v444 = vmul.f32 %v436, %v442
    %v445 = vmul.f32 %v437, %v442
    %v446 = vmul.f32 %v438, %v442
    %v447 = vadd.f32 %v410, %v443
    %v448 = vadd.f32 %v411, %v444
    %v449 = vadd.f32 %v412, %v445
    %v450 = vadd.f32 %v413, %v446
    %s451 = sld [smem:[#allocation3]]
    %vm452 = vcmp.ge.f32.partialorder %v447, 0.0
    %vm453 = vcmp.ge.f32.partialorder %v448, 0.0
    %vm454 = vcmp.ge.f32.partialorder %v449, 0.0
    %vm455 = vcmp.ge.f32.partialorder %v450, 0.0
    %v456 = vstv %s451
    %v457 = vmul.f32 %v456, %v447
    %v458 = vmul.f32 %v456, %v448
    %v459 = vmul.f32 %v456, %v449
    %v460 = vmul.f32 %v456, %v450
    %v461 = vsel %vm452, %v447, %v457
    %v462 = vsel %vm453, %v448, %v458
    %v463 = vsel %vm454, %v449, %v459
    %v464 = vsel %vm455, %v450, %v460
    %v465 = vadd.f32 %v461, %v462
    %v466 = vrot.slane %v465, 4
    %v467 = vadd.f32 %v465, %v466
    %v468 = vrot.slane %v467, 2
    %v469 = vadd.f32 %v467, %v468
    %v470 = vrot.slane %v469, 1
    %v471 = vadd.f32 %v469, %v470
    %v472 = vadd.f32 %v463, %v464
    %v473 = vrot.slane %v472, 4
    %v474 = vadd.f32 %v472, %v473
    %v475 = vrot.slane %v474, 2
    %v476 = vadd.f32 %v474, %v475
    %v477 = vrot.slane %v476, 1
    %v478 = vadd.f32 %v476, %v477
    %v479 = vmul.f32 %v461, %v461
    %v480 = vmul.f32 %v462, %v462
    %v481 = vmul.f32 %v463, %v463
    %v482 = vmul.f32 %v464, %v464
    %v483 = vadd.f32 %v479, %v480
    %v484 = vrot.slane %v483, 4
    %v485 = vadd.f32 %v483, %v484
    %v486 = vrot.slane %v485, 2
    %v487 = vadd.f32 %v485, %v486
    %v488 = vrot.slane %v487, 1
    %v489 = vadd.f32 %v487, %v488
    %v490 = vadd.f32 %v481, %v482
    %v491 = vrot.slane %v490, 4
    %v492 = vadd.f32 %v490, %v491
    %v493 = vrot.slane %v492, 2
    %v494 = vadd.f32 %v492, %v493
    %v495 = vrot.slane %v494, 1
    %v496 = vadd.f32 %v494, %v495
    %v499 = vsel %vm232, %v478, %v471
    %v501 = vsel %vm235, %v499, 0.0
    %502 = vadd.xlane.f32.xlu0 %v501
    %v503 = vpop.xlane.xlu0 %502
    %v506 = vsel %vm232, %v496, %v489
    %v508 = vsel %vm235, %v506, 0.0
    %509 = vadd.xlane.f32.xlu0 %v508
    %v510 = vpop.xlane.xlu0 %509
    %v511 = vmul.f32 %v503, 0.0078125
    %v512 = vmul.f32 %v510, 0.0078125
    %v513 = vmul.f32 %v511, %v511
    %v514 = vsub.f32 %v512, %v513
    %v515 = vmax.f32 %v514, 0.0
    %v516 = vadd.f32 %v515, 1e-08
    %v517 = vrsqrt.pop %v516
    %v518 = vld [vmem:[%s7] sm:$0x1]
    %v520 = vlaneseq
    %v521 = vshrl.u32 %v520, 7
    %v522 = vsub.s32 0, %v521
    %v523 = vrot.slane %v517, %v522
    %v524 = vlaneseq
    %v525 = vshrl.u32 %v524, 7
    %v526 = vsub.s32 1, %v525
    %v527 = vrot.slane %v517, %v526
    %v530 = vmul.f32 %v518, %v523
    %v531 = vmul.f32 %v518, %v527
    %v532 = vld [vmem:[%s8] sm:$0x1]
    %v534 = vlaneseq
    %v535 = vshrl.u32 %v534, 7
    %v536 = vsub.s32 0, %v535
    %v537 = vrot.slane %v511, %v536
    %v538 = vlaneseq
    %v539 = vshrl.u32 %v538, 7
    %v540 = vsub.s32 1, %v539
    %v541 = vrot.slane %v511, %v540
    %v544 = vmul.f32 %v537, %v530
    %v545 = vmul.f32 %v541, %v531
    %v546 = vsub.f32 %v532, %v544
    %v547 = vsub.f32 %v532, %v545
    %v550 = vlaneseq
    %v551 = vshrl.u32 %v550, 7
    %v552 = vsub.s32 0, %v551
    %v553 = vrot.slane %v530, %v552
    %v554 = vlaneseq
    %v555 = vshrl.u32 %v554, 7
    %v556 = vsub.s32 0, %v555
    %v557 = vrot.slane %v531, %v556
    %v560 = vmul.f32 %v461, %v553
    %v561 = vmul.f32 %v462, %v553
    %v562 = vmul.f32 %v463, %v557
    %v563 = vmul.f32 %v464, %v557
    %v566 = vlaneseq
    %v567 = vshrl.u32 %v566, 7
    %v568 = vsub.s32 0, %v567
    %v569 = vrot.slane %v546, %v568
    %v570 = vlaneseq
    %v571 = vshrl.u32 %v570, 7
    %v572 = vsub.s32 0, %v571
    %v573 = vrot.slane %v547, %v572
    %v576 = vadd.f32 %v560, %v569
    %v577 = vadd.f32 %v561, %v569
    %v578 = vadd.f32 %v562, %v573
    %v579 = vadd.f32 %v563, %v573
    %v580 = vld [vmem:[#allocation9] sm:$0xff]
    %v581 = vld [vmem:[#allocation9 + $0x8] sm:$0xff]
    %v582 = vld [vmem:[#allocation9 + $0x10] sm:$0xff]
    %v583 = vld [vmem:[#allocation9 + $0x18] sm:$0xff]
    %v584 = vld [vmem:[#allocation9 + $0x20] sm:$0xff]
    %v585 = vld [vmem:[#allocation9 + $0x28] sm:$0xff]
    %v586 = vld [vmem:[#allocation9 + $0x30] sm:$0xff]
    %v587 = vld [vmem:[#allocation9 + $0x38] sm:$0xff]
    %v588 = vld [vmem:[#allocation9 + $0x40] sm:$0xff]
    %v589 = vld [vmem:[#allocation9 + $0x48] sm:$0xff]
    %v590 = vld [vmem:[#allocation9 + $0x50] sm:$0xff]
    %v591 = vld [vmem:[#allocation9 + $0x58] sm:$0xff]
    %v592 = vld [vmem:[#allocation9 + $0x60] sm:$0xff]
    %v593 = vld [vmem:[#allocation9 + $0x68] sm:$0xff]
    %v594 = vld [vmem:[#allocation9 + $0x70] sm:$0xff]
    %v595 = vld [vmem:[#allocation9 + $0x78] sm:$0xff]
    %596 = vmatprep.subr.mxu0 0.0
    %597 = vmatpush1.msra.mxu0 %v580
    %598 = vmatprep.subr.mxu0 0.0
    %599 = vmatpush1.msra.mxu0 %v581
    %600 = vmatprep.subr.mxu0 0.0
    %601 = vmatpush1.msra.mxu0 %v582
    %602 = vmatprep.subr.mxu0 0.0
    %603 = vmatpush1.msra.mxu0 %v583
    %604 = vmatprep.subr.mxu0 0.0
    %605 = vmatpush1.msra.mxu0 %v584
    %606 = vmatprep.subr.mxu0 0.0
    %607 = vmatpush1.msra.mxu0 %v585
    %608 = vmatprep.subr.mxu0 0.0
    %609 = vmatpush1.msra.mxu0 %v586
    %610 = vmatprep.subr.mxu0 0.0
    %611 = vmatpush1.msra.mxu0 %v587
    %612 = vmatprep.subr.mxu0 0.0
    %613 = vmatpush1.msra.mxu0 %v588
    %614 = vmatprep.subr.mxu0 0.0
    %615 = vmatpush1.msra.mxu0 %v589
    %616 = vmatprep.subr.mxu0 0.0
    %617 = vmatpush1.msra.mxu0 %v590
    %618 = vmatprep.subr.mxu0 0.0
    %619 = vmatpush1.msra.mxu0 %v591
    %620 = vmatprep.subr.mxu0 0.0
    %621 = vmatpush1.msra.mxu0 %v592
    %622 = vmatprep.subr.mxu0 0.0
    %623 = vmatpush1.msra.mxu0 %v593
    %624 = vmatprep.subr.mxu0 0.0
    %625 = vmatpush1.msra.mxu0 %v594
    %626 = vmatprep.subr.mxu0 0.0
    %627 = vmatpush1.msra.mxu0 %v595
    %628 = vmatprep.subr.mxu0 0.0
    %629 = vmatpush1.msra.mxu0 0.0
    %630 = vmatprep.subr.mxu0 0.0
    %631 = vmatpush1.msra.mxu0 0.0
    %632 = vmatprep.subr.mxu0 0.0
    %633 = vmatpush1.msra.mxu0 0.0
    %634 = vmatprep.subr.mxu0 0.0
    %635 = vmatpush1.msra.mxu0 0.0
    %636 = vmatprep.subr.mxu0 0.0
    %637 = vmatpush1.msra.mxu0 0.0
    %638 = vmatprep.subr.mxu0 0.0
    %639 = vmatpush1.msra.mxu0 0.0
    %640 = vmatprep.subr.mxu0 0.0
    %641 = vmatpush1.msra.mxu0 0.0
    %642 = vmatprep.subr.mxu0 0.0
    %643 = vmatpush1.msra.mxu0 0.0
    %644 = vmatprep.subr.mxu0 0.0
    %645 = vmatpush1.msra.mxu0 0.0
    %646 = vmatprep.subr.mxu0 0.0
    %647 = vmatpush1.msra.mxu0 0.0
    %648 = vmatprep.subr.mxu0 0.0
    %649 = vmatpush1.msra.mxu0 0.0
    %650 = vmatprep.subr.mxu0 0.0
    %651 = vmatpush1.msra.mxu0 0.0
    %652 = vmatprep.subr.mxu0 0.0
    %653 = vmatpush1.msra.mxu0 0.0
    %654 = vmatprep.subr.mxu0 0.0
    %655 = vmatpush1.msra.mxu0 0.0
    %656 = vmatprep.subr.mxu0 0.0
    %657 = vmatpush1.msra.mxu0 0.0
    %658 = vmatprep.subr.mxu0 0.0
    %659 = vmatpush1.msra.mxu0 0.0
    %660 = vmatprep.mubr.f32.mxu0 0.0
    %661 = vmatmul.mubr.f32.gmra.mrb[0].mxu0 %v576
    %v662 = vpop.f32.mrb[0].mxu0
    %v663 = vadd.f32 0.0, %v662
    %v664 = vpop.f32.mrb[0].mxu0
    %665 = vmatprep.mubr.f32.mxu0 0.0
    %666 = vmatmul.mubr.f32.gmra.mrb[0].mxu0 %v577
    %v667 = vpop.f32.mrb[0].mxu0
    %v668 = vadd.f32 0.0, %v667
    %v669 = vpop.f32.mrb[0].mxu0
    %670 = vmatprep.mubr.f32.mxu0 0.0
    %671 = vmatmul.mubr.f32.gmra.mrb[0].mxu0 %v578
    %v672 = vpop.f32.mrb[0].mxu0
    %v673 = vadd.f32 0.0, %v672
    %v674 = vpop.f32.mrb[0].mxu0
    %675 = vmatprep.mubr.f32.mxu0 0.0
    %676 = vmatmul.mubr.f32.gmra.mrb[0].mxu0 %v579
    %v677 = vpop.f32.mrb[0].mxu0
    %v678 = vadd.f32 0.0, %v677
    %v679 = vpop.f32.mrb[0].mxu0
    %680 = vdwg.mxu0
    %v681 = vadd.f32 %v663, %v79
    %v682 = vadd.f32 %v668, %v80
    %v683 = vadd.f32 %v673, %v81
    %v684 = vadd.f32 %v678, %v82
    %685 = vst [vmem:[#allocation10] sm:$0xff] %v681
    %686 = vst [vmem:[#allocation10 + $0x8] sm:$0xff] %v682
    %687 = vst [vmem:[#allocation10 + $0x10] sm:$0xff] %v683
    %688 = vst [vmem:[#allocation10 + $0x18] sm:$0xff] %v684
    // Predicated region
    $region54: #{tpu_custom_call.1} parent=1 // pred_check
      _
    $region55: #{tpu_custom_call.1} parent=1 // pred_check_branch
      %690 = sbr.rel (0) target = $region57
    $region56: #{tpu_custom_call.1} parent=1 // pred_region
      %s692 = ssub.s32 512, 512
      %693 = vsyncadd [#allocation6], %s692
      %s694 = sshll.u32 [#allocation10], 4
      %s695 = int_to_ptr.vmem [resolvable:$true] %s694
      %700 = dma.vmem_to_hbm [thread:$0]  %s695, 512, %s10, [#allocation6], 128, 128, 8
    $region57: #{tpu_custom_call.1} parent=1 // pred_fallthru
      _
    // Predicated region
    $region58: #{tpu_custom_call.1} parent=1 // pred_check
      _
    $region59: #{tpu_custom_call.1} parent=1 // pred_check_branch
      %702 = sbr.rel (0) target = $region61
    $region60: #{tpu_custom_call.1} parent=1 // pred_region
      %703 = dma.done [#allocation6], 512
    $region61: #{tpu_custom_call.1} parent=1 // pred_fallthru
      _
    %704 = vsyncpa [#allocation5], 1
    %705 = vsyncpa [#allocation8], 1
    %706 = vsyncpa [#allocation6], 1

// kernel: tpu_custom_call.1
$region0: #{tpu_custom_call.1}
  #allocation0 [shape = 'u32[]', space=smem, size = 0x4, offset = 0x4, fixed_abs, tag = 'smem constant byte address 0x4 - core index']
  #allocation1 [shape = 'u32[144,128]{1,0:T(1,128)}', space=vmem, size = 0x12000, scoped, tag = 'internal scratch']
  #allocation2 [shape = 'f32[1]{0:T(128)S(6)}', space=smem, size = 0x200, scoped, tag = 'scoped memory for tpu_custom_call.1']
  #allocation3 [shape = 'f32[1]{0:T(128)S(6)}', space=smem, size = 0x200, scoped, tag = 'scoped memory for tpu_custom_call.1']
  %s0 = inlined_call_operand.hbm [shape: f32[2,16,128], index: 0, kind: input, shape index: {}]
  %s1 = inlined_call_operand.hbm [shape: f32[128,128], index: 1, kind: input, shape index: {}]
  %s2 = inlined_call_operand.<no memory space> [shape: f32[1], index: 2, kind: input, shape index: {}]
  %s3 = inlined_call_operand.vmem [shape: f32[1,128], index: 3, kind: input, shape index: {}]
  %s4 = inlined_call_operand.vmem [shape: f32[1,128], index: 4, kind: input, shape index: {}]
  %s5 = inlined_call_operand.vmem [shape: f32[3,128], index: 5, kind: input, shape index: {}]
  %s6 = inlined_call_operand.<no memory space> [shape: f32[1], index: 6, kind: input, shape index: {}]
  %s7 = inlined_call_operand.vmem [shape: f32[1,128], index: 7, kind: input, shape index: {}]
  %s8 = inlined_call_operand.vmem [shape: f32[1,128], index: 8, kind: input, shape index: {}]
  %s9 = inlined_call_operand.hbm [shape: f32[128,128], index: 9, kind: input, shape index: {}]
  %s10 = inlined_call_operand.hbm [shape: f32[2,16,128], index: 10, kind: output, shape index: {}]
  %s11 = sld [smem:[#allocation0]]
  $region62: #{tpu_custom_call.1} parent=0
    _
  %s13 = ssub.s32 1, %s11
  %s14 = scalar_select 0, %s13, %s11
  %15 = sst [smem:[#allocation2]] %s2
  %16 = sst [smem:[#allocation3]] %s6
  $region1: #{tpu_custom_call.1} parent=0
    #allocation4 [shape = 'u8[16384]{0}', space=vmem, size = 0x4000, scoped, tag = 'input window, operand 0, single buffered']
    #allocation5 [shape = 's32[1]{0}', space=sflag, size = 0x4, scoped, tag = 'scoped memory for tpu_custom_call.1']
    #allocation6 [shape = 's32[1]{0}', space=sflag, size = 0x4, scoped, tag = 'scoped memory for tpu_custom_call.1']
    #allocation7 [shape = 'u8[65536]{0}', space=vmem, size = 0x10000, scoped, tag = 'input window, operand 1, single buffered']
    #allocation8 [shape = 's32[1]{0}', space=sflag, size = 0x4, scoped, tag = 'scoped memory for tpu_custom_call.1']
    #allocation9 [shape = 'u8[65536]{0}', space=vmem, size = 0x10000, scoped, tag = 'input window, operand 9, single buffered']
    #allocation10 [shape = 'u8[16384]{0}', space=vmem, size = 0x4000, scoped, tag = 'output window, operand 0, single buffered']
    %17 = vsyncpa [#allocation5], 0
    %18 = vsyncpa [#allocation8], 0
    %19 = vsyncpa [#allocation6], 0
    // Predicated region
    $region2: #{tpu_custom_call.1} parent=1 // pred_check
      _
    $region3: #{tpu_custom_call.1} parent=1 // pred_check_branch
      %21 = sbr.rel (0) target = $region5
    $region4: #{tpu_custom_call.1} parent=1 // pred_region
      %s23 = ssub.s32 512, 512
      %24 = vsyncadd [#allocation5], %s23
      %s25 = sshll.u32 [#allocation4], 4
      %s26 = int_to_ptr.vmem [resolvable:$true] %s25
      %31 = dma.hbm_to_vmem [thread:$0]  %s0, 512, %s26, [#allocation5], 128, 128, 8
    $region5: #{tpu_custom_call.1} parent=1 // pred_fallthru
      _
    // Predicated region
    $region6: #{tpu_custom_call.1} parent=1 // pred_check
      _
    $region7: #{tpu_custom_call.1} parent=1 // pred_check_branch
      %33 = sbr.rel (0) target = $region9
    $region8: #{tpu_custom_call.1} parent=1 // pred_region
      %s35 = ssub.s32 2048, 2048
      %36 = vsyncadd [#allocation8], %s35
      %s37 = sshll.u32 [#allocation7], 4
      %s38 = int_to_ptr.vmem [resolvable:$true] %s37
      %43 = dma.hbm_to_vmem [thread:$0]  %s1, 2048, %s38, [#allocation8], 128, 128, 8
    $region9: #{tpu_custom_call.1} parent=1 // pred_fallthru
      _
    // Predicated region
    $region10: #{tpu_custom_call.1} parent=1 // pred_check
      _
    $region11: #{tpu_custom_call.1} parent=1 // pred_check_branch
      %45 = sbr.rel (0) target = $region13
    $region12: #{tpu_custom_call.1} parent=1 // pred_region
      _
    $region13: #{tpu_custom_call.1} parent=1 // pred_fallthru
      _
    // Predicated region
    $region14: #{tpu_custom_call.1} parent=1 // pred_check
      _
    $region15: #{tpu_custom_call.1} parent=1 // pred_check_branch
      %47 = sbr.rel (0) target = $region17
    $region16: #{tpu_custom_call.1} parent=1 // pred_region
      _
    $region17: #{tpu_custom_call.1} parent=1 // pred_fallthru
      _
    // Predicated region
    $region18: #{tpu_custom_call.1} parent=1 // pred_check
      _
    $region19: #{tpu_custom_call.1} parent=1 // pred_check_branch
      %49 = sbr.rel (0) target = $region21
    $region20: #{tpu_custom_call.1} parent=1 // pred_region
      _
    $region21: #{tpu_custom_call.1} parent=1 // pred_fallthru
      _
    // Predicated region
    $region22: #{tpu_custom_call.1} parent=1 // pred_check
      _
    $region23: #{tpu_custom_call.1} parent=1 // pred_check_branch
      %51 = sbr.rel (0) target = $region25
    $region24: #{tpu_custom_call.1} parent=1 // pred_region
      _
    $region25: #{tpu_custom_call.1} parent=1 // pred_fallthru
      _
    // Predicated region
    $region26: #{tpu_custom_call.1} parent=1 // pred_check
      _
    $region27: #{tpu_custom_call.1} parent=1 // pred_check_branch
      %53 = sbr.rel (0) target = $region29
    $region28: #{tpu_custom_call.1} parent=1 // pred_region
      _
    $region29: #{tpu_custom_call.1} parent=1 // pred_fallthru
      _
    // Predicated region
    $region30: #{tpu_custom_call.1} parent=1 // pred_check
      _
    $region31: #{tpu_custom_call.1} parent=1 // pred_check_branch
      %55 = sbr.rel (0) target = $region33
    $region32: #{tpu_custom_call.1} parent=1 // pred_region
      _
    $region33: #{tpu_custom_call.1} parent=1 // pred_fallthru
      _
    // Predicated region
    $region34: #{tpu_custom_call.1} parent=1 // pred_check
      _
    $region35: #{tpu_custom_call.1} parent=1 // pred_check_branch
      %57 = sbr.rel (0) target = $region37
    $region36: #{tpu_custom_call.1} parent=1 // pred_region
      _
    $region37: #{tpu_custom_call.1} parent=1 // pred_fallthru
      _
    // Predicated region
    $region38: #{tpu_custom_call.1} parent=1 // pred_check
      _
    $region39: #{tpu_custom_call.1} parent=1 // pred_check_branch
      %59 = sbr.rel (0) target = $region41
    $region40: #{tpu_custom_call.1} parent=1 // pred_region
      %s61 = ssub.s32 2048, 2048
      %62 = vsyncadd [#allocation8], %s61
      %s63 = sshll.u32 [#allocation9], 4
      %s64 = int_to_ptr.vmem [resolvable:$true] %s63
      %69 = dma.hbm_to_vmem [thread:$0]  %s9, 2048, %s64, [#allocation8], 128, 128, 8
    $region41: #{tpu_custom_call.1} parent=1 // pred_fallthru
      _
    // Predicated region
    $region42: #{tpu_custom_call.1} parent=1 // pred_check
      _
    $region43: #{tpu_custom_call.1} parent=1 // pred_check_branch
      %71 = sbr.rel (0) target = $region45
    $region44: #{tpu_custom_call.1} parent=1 // pred_region
      %72 = dma.done [#allocation5], 512
    $region45: #{tpu_custom_call.1} parent=1 // pred_fallthru
      _
    // Predicated region
    $region46: #{tpu_custom_call.1} parent=1 // pred_check
      _
    $region47: #{tpu_custom_call.1} parent=1 // pred_check_branch
      %74 = sbr.rel (0) target = $region49
    $region48: #{tpu_custom_call.1} parent=1 // pred_region
      %75 = dma.done [#allocation8], 2048
    $region49: #{tpu_custom_call.1} parent=1 // pred_fallthru
      _
    // Predicated region
    $region50: #{tpu_custom_call.1} parent=1 // pred_check
      _
    $region51: #{tpu_custom_call.1} parent=1 // pred_check_branch
      %77 = sbr.rel (0) target = $region53
    $region52: #{tpu_custom_call.1} parent=1 // pred_region
      %78 = dma.done [#allocation8], 2048
    $region53: #{tpu_custom_call.1} parent=1 // pred_fallthru
      _
    %v79 = vld [vmem:[#allocation4] sm:$0xff]
    %v80 = vld [vmem:[#allocation4 + $0x8] sm:$0xff]
    %v81 = vld [vmem:[#allocation4 + $0x10] sm:$0xff]
    %v82 = vld [vmem:[#allocation4 + $0x18] sm:$0xff]
    %v83 = vld [vmem:[#allocation7] sm:$0xff]
    %v84 = vld [vmem:[#allocation7 + $0x8] sm:$0xff]
    %v85 = vld [vmem:[#allocation7 + $0x10] sm:$0xff]
    %v86 = vld [vmem:[#allocation7 + $0x18] sm:$0xff]
    %v87 = vld [vmem:[#allocation7 + $0x20] sm:$0xff]
    %v88 = vld [vmem:[#allocation7 + $0x28] sm:$0xff]
    %v89 = vld [vmem:[#allocation7 + $0x30] sm:$0xff]
    %v90 = vld [vmem:[#allocation7 + $0x38] sm:$0xff]
    %v91 = vld [vmem:[#allocation7 + $0x40] sm:$0xff]
    %v92 = vld [vmem:[#allocation7 + $0x48] sm:$0xff]
    %v93 = vld [vmem:[#allocation7 + $0x50] sm:$0xff]
    %v94 = vld [vmem:[#allocation7 + $0x58] sm:$0xff]
    %v95 = vld [vmem:[#allocation7 + $0x60] sm:$0xff]
    %v96 = vld [vmem:[#allocation7 + $0x68] sm:$0xff]
    %v97 = vld [vmem:[#allocation7 + $0x70] sm:$0xff]
    %v98 = vld [vmem:[#allocation7 + $0x78] sm:$0xff]
    %99 = vmatprep.subr.mxu0 0.0
    %100 = vmatpush1.msra.mxu0 %v83
    %101 = vmatprep.subr.mxu0 0.0
    %102 = vmatpush1.msra.mxu0 %v84
    %103 = vmatprep.subr.mxu0 0.0
    %104 = vmatpush1.msra.mxu0 %v85
    %105 = vmatprep.subr.mxu0 0.0
    %106 = vmatpush1.msra.mxu0 %v86
    %107 = vmatprep.subr.mxu0 0.0
    %108 = vmatpush1.msra.mxu0 %v87
    %109 = vmatprep.subr.mxu0 0.0
    %110 = vmatpush1.msra.mxu0 %v88
    %111 = vmatprep.subr.mxu0 0.0
    %112 = vmatpush1.msra.mxu0 %v89
    %113 = vmatprep.subr.mxu0 0.0
    %114 = vmatpush1.msra.mxu0 %v90
    %115 = vmatprep.subr.mxu0 0.0
    %116 = vmatpush1.msra.mxu0 %v91
    %117 = vmatprep.subr.mxu0 0.0
    %118 = vmatpush1.msra.mxu0 %v92
    %119 = vmatprep.subr.mxu0 0.0
    %120 = vmatpush1.msra.mxu0 %v93
    %121 = vmatprep.subr.mxu0 0.0
    %122 = vmatpush1.msra.mxu0 %v94
    %123 = vmatprep.subr.mxu0 0.0
    %124 = vmatpush1.msra.mxu0 %v95
    %125 = vmatprep.subr.mxu0 0.0
    %126 = vmatpush1.msra.mxu0 %v96
    %127 = vmatprep.subr.mxu0 0.0
    %128 = vmatpush1.msra.mxu0 %v97
    %129 = vmatprep.subr.mxu0 0.0
    %130 = vmatpush1.msra.mxu0 %v98
    %131 = vmatprep.subr.mxu0 0.0
    %132 = vmatpush1.msra.mxu0 0.0
    %133 = vmatprep.subr.mxu0 0.0
    %134 = vmatpush1.msra.mxu0 0.0
    %135 = vmatprep.subr.mxu0 0.0
    %136 = vmatpush1.msra.mxu0 0.0
    %137 = vmatprep.subr.mxu0 0.0
    %138 = vmatpush1.msra.mxu0 0.0
    %139 = vmatprep.subr.mxu0 0.0
    %140 = vmatpush1.msra.mxu0 0.0
    %141 = vmatprep.subr.mxu0 0.0
    %142 = vmatpush1.msra.mxu0 0.0
    %143 = vmatprep.subr.mxu0 0.0
    %144 = vmatpush1.msra.mxu0 0.0
    %145 = vmatprep.subr.mxu0 0.0
    %146 = vmatpush1.msra.mxu0 0.0
    %147 = vmatprep.subr.mxu0 0.0
    %148 = vmatpush1.msra.mxu0 0.0
    %149 = vmatprep.subr.mxu0 0.0
    %150 = vmatpush1.msra.mxu0 0.0
    %151 = vmatprep.subr.mxu0 0.0
    %152 = vmatpush1.msra.mxu0 0.0
    %153 = vmatprep.subr.mxu0 0.0
    %154 = vmatpush1.msra.mxu0 0.0
    %155 = vmatprep.subr.mxu0 0.0
    %156 = vmatpush1.msra.mxu0 0.0
    %157 = vmatprep.subr.mxu0 0.0
    %158 = vmatpush1.msra.mxu0 0.0
    %159 = vmatprep.subr.mxu0 0.0
    %160 = vmatpush1.msra.mxu0 0.0
    %161 = vmatprep.subr.mxu0 0.0
    %162 = vmatpush1.msra.mxu0 0.0
    %163 = vmatprep.mubr.f32.mxu0 0.0
    %164 = vmatmul.mubr.f32.gmra.mrb[0].mxu0 %v79
    %v165 = vpop.f32.mrb[0].mxu0
    %v166 = vadd.f32 0.0, %v165
    %v167 = vpop.f32.mrb[0].mxu0
    %168 = vmatprep.mubr.f32.mxu0 0.0
    %169 = vmatmul.mubr.f32.gmra.mrb[0].mxu0 %v80
    %v170 = vpop.f32.mrb[0].mxu0
    %v171 = vadd.f32 0.0, %v170
    %v172 = vpop.f32.mrb[0].mxu0
    %173 = vmatprep.mubr.f32.mxu0 0.0
    %174 = vmatmul.mubr.f32.gmra.mrb[0].mxu0 %v81
    %v175 = vpop.f32.mrb[0].mxu0
    %v176 = vadd.f32 0.0, %v175
    %v177 = vpop.f32.mrb[0].mxu0
    %178 = vmatprep.mubr.f32.mxu0 0.0
    %179 = vmatmul.mubr.f32.gmra.mrb[0].mxu0 %v82
    %v180 = vpop.f32.mrb[0].mxu0
    %v181 = vadd.f32 0.0, %v180
    %v182 = vpop.f32.mrb[0].mxu0
    %183 = vdwg.mxu0
    %s184 = sld [smem:[#allocation2]]
    %vm185 = vcmp.ge.f32.partialorder %v166, 0.0
    %vm186 = vcmp.ge.f32.partialorder %v171, 0.0
    %vm187 = vcmp.ge.f32.partialorder %v176, 0.0
    %vm188 = vcmp.ge.f32.partialorder %v181, 0.0
    %v189 = vstv %s184
    %v190 = vmul.f32 %v189, %v166
    %v191 = vmul.f32 %v189, %v171
    %v192 = vmul.f32 %v189, %v176
    %v193 = vmul.f32 %v189, %v181
    %v194 = vsel %vm185, %v166, %v190
    %v195 = vsel %vm186, %v171, %v191
    %v196 = vsel %vm187, %v176, %v192
    %v197 = vsel %vm188, %v181, %v193
    %v198 = vadd.f32 %v194, %v195
    %v199 = vrot.slane %v198, 4
    %v200 = vadd.f32 %v198, %v199
    %v201 = vrot.slane %v200, 2
    %v202 = vadd.f32 %v200, %v201
    %v203 = vrot.slane %v202, 1
    %v204 = vadd.f32 %v202, %v203
    %v205 = vadd.f32 %v196, %v197
    %v206 = vrot.slane %v205, 4
    %v207 = vadd.f32 %v205, %v206
    %v208 = vrot.slane %v207, 2
    %v209 = vadd.f32 %v207, %v208
    %v210 = vrot.slane %v209, 1
    %v211 = vadd.f32 %v209, %v210
    %v212 = vmul.f32 %v194, %v194
    %v213 = vmul.f32 %v195, %v195
    %v214 = vmul.f32 %v196, %v196
    %v215 = vmul.f32 %v197, %v197
    %v216 = vadd.f32 %v212, %v213
    %v217 = vrot.slane %v216, 4
    %v218 = vadd.f32 %v216, %v217
    %v219 = vrot.slane %v218, 2
    %v220 = vadd.f32 %v218, %v219
    %v221 = vrot.slane %v220, 1
    %v222 = vadd.f32 %v220, %v221
    %v223 = vadd.f32 %v214, %v215
    %v224 = vrot.slane %v223, 4
    %v225 = vadd.f32 %v223, %v224
    %v226 = vrot.slane %v225, 2
    %v227 = vadd.f32 %v225, %v226
    %v228 = vrot.slane %v227, 1
    %v229 = vadd.f32 %v227, %v228
    %vm232 = vcmask 1041409
    %v233 = vsel %vm232, %v211, %v204
    %vm235 = vcmask 1041408
    %v236 = vsel %vm235, %v233, 0.0
    %237 = vadd.xlane.f32.xlu0 %v236
    %v238 = vpop.xlane.xlu0 %237
    %v241 = vsel %vm232, %v229, %v222
    %v243 = vsel %vm235, %v241, 0.0
    %244 = vadd.xlane.f32.xlu0 %v243
    %v245 = vpop.xlane.xlu0 %244
    %v246 = vmul.f32 %v238, 0.0078125
    %v247 = vmul.f32 %v245, 0.0078125
    %v248 = vmul.f32 %v246, %v246
    %v249 = vsub.f32 %v247, %v248
    %v250 = vmax.f32 %v249, 0.0
    %v251 = vadd.f32 %v250, 1e-08
    %v252 = vrsqrt.pop %v251
    %v253 = vld [vmem:[%s3] sm:$0x1]
    %v255 = vlaneseq
    %v256 = vshrl.u32 %v255, 7
    %v257 = vsub.s32 0, %v256
    %v258 = vrot.slane %v252, %v257
    %v259 = vlaneseq
    %v260 = vshrl.u32 %v259, 7
    %v261 = vsub.s32 1, %v260
    %v262 = vrot.slane %v252, %v261
    %v265 = vmul.f32 %v253, %v258
    %v266 = vmul.f32 %v253, %v262
    %v267 = vld [vmem:[%s4] sm:$0x1]
    %v269 = vlaneseq
    %v270 = vshrl.u32 %v269, 7
    %v271 = vsub.s32 0, %v270
    %v272 = vrot.slane %v246, %v271
    %v273 = vlaneseq
    %v274 = vshrl.u32 %v273, 7
    %v275 = vsub.s32 1, %v274
    %v276 = vrot.slane %v246, %v275
    %v279 = vmul.f32 %v272, %v265
    %v280 = vmul.f32 %v276, %v266
    %v281 = vsub.f32 %v267, %v279
    %v282 = vsub.f32 %v267, %v280
    %v285 = vlaneseq
    %v286 = vshrl.u32 %v285, 7
    %v287 = vsub.s32 0, %v286
    %v288 = vrot.slane %v265, %v287
    %v289 = vlaneseq
    %v290 = vshrl.u32 %v289, 7
    %v291 = vsub.s32 0, %v290
    %v292 = vrot.slane %v266, %v291
    %v295 = vmul.f32 %v194, %v288
    %v296 = vmul.f32 %v195, %v288
    %v297 = vmul.f32 %v196, %v292
    %v298 = vmul.f32 %v197, %v292
    %v301 = vlaneseq
    %v302 = vshrl.u32 %v301, 7
    %v303 = vsub.s32 0, %v302
    %v304 = vrot.slane %v281, %v303
    %v305 = vlaneseq
    %v306 = vshrl.u32 %v305, 7
    %v307 = vsub.s32 0, %v306
    %v308 = vrot.slane %v282, %v307
    %v311 = vadd.f32 %v295, %v304
    %v312 = vadd.f32 %v296, %v304
    %v313 = vadd.f32 %v297, %v308
    %v314 = vadd.f32 %v298, %v308
    %v315 = vld [vmem:[%s5] sm:$0x7]
    %v316 = vlaneseq
    %v317 = vshrl.u32 %v316, 7
    %v318 = vadd.s32 %v317, 8
    %v319 = vadd.s32 %v317, 16
    %v320 = vadd.s32 %v317, 24
    %vm321 = vcmp.lt.s32.totalorder %v317, 0
    %v322 = vsub.s32 0, %v317
    %v323 = vsel %vm321, %v322, %v317
    %v324 = vshrl.u32 %v323, 4
    %v325 = vand.u32 %v323, 15
    %v326 = vsub.s32 0, %v325
    %v327 = vsel %vm321, %v326, %v325
    %vm328 = vcmp.lt.s32.totalorder %v318, 0
    %v329 = vsub.s32 0, %v318
    %v330 = vsel %vm328, %v329, %v318
    %v331 = vshrl.u32 %v330, 4
    %v332 = vand.u32 %v330, 15
    %v333 = vsub.s32 0, %v332
    %v334 = vsel %vm328, %v333, %v332
    %vm335 = vcmp.lt.s32.totalorder %v319, 0
    %v336 = vsub.s32 0, %v319
    %v337 = vsel %vm335, %v336, %v319
    %v338 = vshrl.u32 %v337, 4
    %v339 = vand.u32 %v337, 15
    %v340 = vsub.s32 0, %v339
    %v341 = vsel %vm335, %v340, %v339
    %vm342 = vcmp.lt.s32.totalorder %v320, 0
    %v343 = vsub.s32 0, %v320
    %v344 = vsel %vm342, %v343, %v320
    %v345 = vshrl.u32 %v344, 4
    %v346 = vand.u32 %v344, 15
    %v347 = vsub.s32 0, %v346
    %v348 = vsel %vm342, %v347, %v346
    %vm349 = vcmp.ne.s32.totalorder %v327, 0
    %vm350 = vcmp.ne.s32.totalorder %v334, 0
    %vm351 = vcmp.ne.s32.totalorder %v341, 0
    %vm352 = vcmp.ne.s32.totalorder %v348, 0
    %vm353 = vcmp.lt.s32.totalorder %v327, 0
    %vm354 = vcmp.lt.s32.totalorder %v334, 0
    %vm355 = vcmp.lt.s32.totalorder %v341, 0
    %vm356 = vcmp.lt.s32.totalorder %v348, 0
    %vm357 = vmand %vm353, %vm349
    %vm358 = vmand %vm354, %vm350
    %vm359 = vmand %vm355, %vm351
    %vm360 = vmand %vm356, %vm352
    %v361 = vadd.s32 %v327, 16
    %v362 = vadd.s32 %v334, 16
    %v363 = vadd.s32 %v341, 16
    %v364 = vadd.s32 %v348, 16
    %v365 = vsel %vm357, %v361, %v327
    %v366 = vsel %vm358, %v362, %v334
    %v367 = vsel %vm359, %v363, %v341
    %v368 = vsel %vm360, %v364, %v348
    %vm369 = vcmp.ge.s32.totalorder %v365, 2
    %vm370 = vcmp.ge.s32.totalorder %v366, 2
    %vm371 = vcmp.ge.s32.totalorder %v367, 2
    %vm372 = vcmp.ge.s32.totalorder %v368, 2
    %v377 = vrot.slane %v311, 6
    %v378 = vrot.slane %v312, 6
    %v379 = vsel %vm235, %v377, %v378
    %v380 = vrot.slane %v313, 6
    %v381 = vsel %vm235, %v378, %v380
    %v382 = vrot.slane %v314, 6
    %v383 = vsel %vm235, %v380, %v382
    %v388 = vsel %vm235, 0.0, %v377
    %v389 = vsel %vm369, 1, 0
    %v390 = vsel %vm370, 1, 0
    %v391 = vsel %vm371, 1, 0
    %v392 = vsel %vm372, 1, 0
    %vm393 = vcmp.eq.s32.totalorder %v389, 1
    %vm394 = vcmp.eq.s32.totalorder %v390, 1
    %vm395 = vcmp.eq.s32.totalorder %v391, 1
    %vm396 = vcmp.eq.s32.totalorder %v392, 1
    %v397 = vsel %vm393, %v388, 0.0
    %v398 = vsel %vm394, %v379, 0.0
    %v399 = vsel %vm395, %v381, 0.0
    %v400 = vsel %vm396, %v383, 0.0
    %v401 = vlaneseq
    %v402 = vshrl.u32 %v401, 7
    %v403 = vsub.s32 0, %v402
    %v404 = vrot.slane %v315, %v403
    %v405 = vmul.f32 %v397, %v404
    %v406 = vmul.f32 %v398, %v404
    %v407 = vmul.f32 %v399, %v404
    %v408 = vmul.f32 %v400, %v404
    %v409 = vlaneseq
    %v410 = vshrl.u32 %v409, 7
    %v411 = vsub.s32 1, %v410
    %v412 = vrot.slane %v315, %v411
    %v413 = vmul.f32 %v311, %v412
    %v414 = vmul.f32 %v312, %v412
    %v415 = vmul.f32 %v313, %v412
    %v416 = vmul.f32 %v314, %v412
    %v417 = vadd.f32 %v405, %v413
    %v418 = vadd.f32 %v406, %v414
    %v419 = vadd.f32 %v407, %v415
    %v420 = vadd.f32 %v408, %v416
    %vm421 = vcmp.lt.s32.totalorder %v365, 14
    %vm422 = vcmp.lt.s32.totalorder %v366, 14
    %vm423 = vcmp.lt.s32.totalorder %v367, 14
    %vm424 = vcmp.lt.s32.totalorder %v368, 14
    %vm425 = vcmask 1045504
    %v426 = vrot.slane %v311, 2
    %v427 = vrot.slane %v312, 2
    %v428 = vsel %vm425, %v426, %v427
    %v429 = vrot.slane %v313, 2
    %v430 = vsel %vm425, %v427, %v429
    %v431 = vrot.slane %v314, 2
    %v432 = vsel %vm425, %v429, %v431
    %v437 = vsel %vm425, %v431, 0.0
    %v438 = vsel %vm421, 1, 0
    %v439 = vsel %vm422, 1, 0
    %v440 = vsel %vm423, 1, 0
    %v441 = vsel %vm424, 1, 0
    %vm442 = vcmp.eq.s32.totalorder %v438, 1
    %vm443 = vcmp.eq.s32.totalorder %v439, 1
    %vm444 = vcmp.eq.s32.totalorder %v440, 1
    %vm445 = vcmp.eq.s32.totalorder %v441, 1
    %v446 = vsel %vm442, %v428, 0.0
    %v447 = vsel %vm443, %v430, 0.0
    %v448 = vsel %vm444, %v432, 0.0
    %v449 = vsel %vm445, %v437, 0.0
    %v450 = vlaneseq
    %v451 = vshrl.u32 %v450, 7
    %v452 = vsub.s32 2, %v451
    %v453 = vrot.slane %v315, %v452
    %v454 = vmul.f32 %v446, %v453
    %v455 = vmul.f32 %v447, %v453
    %v456 = vmul.f32 %v448, %v453
    %v457 = vmul.f32 %v449, %v453
    %v458 = vadd.f32 %v417, %v454
    %v459 = vadd.f32 %v418, %v455
    %v460 = vadd.f32 %v419, %v456
    %v461 = vadd.f32 %v420, %v457
    %s462 = sld [smem:[#allocation3]]
    %vm463 = vcmp.ge.f32.partialorder %v458, 0.0
    %vm464 = vcmp.ge.f32.partialorder %v459, 0.0
    %vm465 = vcmp.ge.f32.partialorder %v460, 0.0
    %vm466 = vcmp.ge.f32.partialorder %v461, 0.0
    %v467 = vstv %s462
    %v468 = vmul.f32 %v467, %v458
    %v469 = vmul.f32 %v467, %v459
    %v470 = vmul.f32 %v467, %v460
    %v471 = vmul.f32 %v467, %v461
    %v472 = vsel %vm463, %v458, %v468
    %v473 = vsel %vm464, %v459, %v469
    %v474 = vsel %vm465, %v460, %v470
    %v475 = vsel %vm466, %v461, %v471
    %v476 = vadd.f32 %v472, %v473
    %v477 = vrot.slane %v476, 4
    %v478 = vadd.f32 %v476, %v477
    %v479 = vrot.slane %v478, 2
    %v480 = vadd.f32 %v478, %v479
    %v481 = vrot.slane %v480, 1
    %v482 = vadd.f32 %v480, %v481
    %v483 = vadd.f32 %v474, %v475
    %v484 = vrot.slane %v483, 4
    %v485 = vadd.f32 %v483, %v484
    %v486 = vrot.slane %v485, 2
    %v487 = vadd.f32 %v485, %v486
    %v488 = vrot.slane %v487, 1
    %v489 = vadd.f32 %v487, %v488
    %v490 = vmul.f32 %v472, %v472
    %v491 = vmul.f32 %v473, %v473
    %v492 = vmul.f32 %v474, %v474
    %v493 = vmul.f32 %v475, %v475
    %v494 = vadd.f32 %v490, %v491
    %v495 = vrot.slane %v494, 4
    %v496 = vadd.f32 %v494, %v495
    %v497 = vrot.slane %v496, 2
    %v498 = vadd.f32 %v496, %v497
    %v499 = vrot.slane %v498, 1
    %v500 = vadd.f32 %v498, %v499
    %v501 = vadd.f32 %v492, %v493
    %v502 = vrot.slane %v501, 4
    %v503 = vadd.f32 %v501, %v502
    %v504 = vrot.slane %v503, 2
    %v505 = vadd.f32 %v503, %v504
    %v506 = vrot.slane %v505, 1
    %v507 = vadd.f32 %v505, %v506
    %v510 = vsel %vm232, %v489, %v482
    %v512 = vsel %vm235, %v510, 0.0
    %513 = vadd.xlane.f32.xlu0 %v512
    %v514 = vpop.xlane.xlu0 %513
    %v517 = vsel %vm232, %v507, %v500
    %v519 = vsel %vm235, %v517, 0.0
    %520 = vadd.xlane.f32.xlu0 %v519
    %v521 = vpop.xlane.xlu0 %520
    %v522 = vmul.f32 %v514, 0.0078125
    %v523 = vmul.f32 %v521, 0.0078125
    %v524 = vmul.f32 %v522, %v522
    %v525 = vsub.f32 %v523, %v524
    %v526 = vmax.f32 %v525, 0.0
    %v527 = vadd.f32 %v526, 1e-08
    %v528 = vrsqrt.pop %v527
    %v529 = vld [vmem:[%s7] sm:$0x1]
    %v531 = vlaneseq
    %v532 = vshrl.u32 %v531, 7
    %v533 = vsub.s32 0, %v532
    %v534 = vrot.slane %v528, %v533
    %v535 = vlaneseq
    %v536 = vshrl.u32 %v535, 7
    %v537 = vsub.s32 1, %v536
    %v538 = vrot.slane %v528, %v537
    %v541 = vmul.f32 %v529, %v534
    %v542 = vmul.f32 %v529, %v538
    %v543 = vld [vmem:[%s8] sm:$0x1]
    %v545 = vlaneseq
    %v546 = vshrl.u32 %v545, 7
    %v547 = vsub.s32 0, %v546
    %v548 = vrot.slane %v522, %v547
    %v549 = vlaneseq
    %v550 = vshrl.u32 %v549, 7
    %v551 = vsub.s32 1, %v550
    %v552 = vrot.slane %v522, %v551
    %v555 = vmul.f32 %v548, %v541
    %v556 = vmul.f32 %v552, %v542
    %v557 = vsub.f32 %v543, %v555
    %v558 = vsub.f32 %v543, %v556
    %v561 = vlaneseq
    %v562 = vshrl.u32 %v561, 7
    %v563 = vsub.s32 0, %v562
    %v564 = vrot.slane %v541, %v563
    %v565 = vlaneseq
    %v566 = vshrl.u32 %v565, 7
    %v567 = vsub.s32 0, %v566
    %v568 = vrot.slane %v542, %v567
    %v571 = vmul.f32 %v472, %v564
    %v572 = vmul.f32 %v473, %v564
    %v573 = vmul.f32 %v474, %v568
    %v574 = vmul.f32 %v475, %v568
    %v577 = vlaneseq
    %v578 = vshrl.u32 %v577, 7
    %v579 = vsub.s32 0, %v578
    %v580 = vrot.slane %v557, %v579
    %v581 = vlaneseq
    %v582 = vshrl.u32 %v581, 7
    %v583 = vsub.s32 0, %v582
    %v584 = vrot.slane %v558, %v583
    %v587 = vadd.f32 %v571, %v580
    %v588 = vadd.f32 %v572, %v580
    %v589 = vadd.f32 %v573, %v584
    %v590 = vadd.f32 %v574, %v584
    %v591 = vld [vmem:[#allocation9] sm:$0xff]
    %v592 = vld [vmem:[#allocation9 + $0x8] sm:$0xff]
    %v593 = vld [vmem:[#allocation9 + $0x10] sm:$0xff]
    %v594 = vld [vmem:[#allocation9 + $0x18] sm:$0xff]
    %v595 = vld [vmem:[#allocation9 + $0x20] sm:$0xff]
    %v596 = vld [vmem:[#allocation9 + $0x28] sm:$0xff]
    %v597 = vld [vmem:[#allocation9 + $0x30] sm:$0xff]
    %v598 = vld [vmem:[#allocation9 + $0x38] sm:$0xff]
    %v599 = vld [vmem:[#allocation9 + $0x40] sm:$0xff]
    %v600 = vld [vmem:[#allocation9 + $0x48] sm:$0xff]
    %v601 = vld [vmem:[#allocation9 + $0x50] sm:$0xff]
    %v602 = vld [vmem:[#allocation9 + $0x58] sm:$0xff]
    %v603 = vld [vmem:[#allocation9 + $0x60] sm:$0xff]
    %v604 = vld [vmem:[#allocation9 + $0x68] sm:$0xff]
    %v605 = vld [vmem:[#allocation9 + $0x70] sm:$0xff]
    %v606 = vld [vmem:[#allocation9 + $0x78] sm:$0xff]
    %607 = vmatprep.subr.mxu0 0.0
    %608 = vmatpush1.msra.mxu0 %v591
    %609 = vmatprep.subr.mxu0 0.0
    %610 = vmatpush1.msra.mxu0 %v592
    %611 = vmatprep.subr.mxu0 0.0
    %612 = vmatpush1.msra.mxu0 %v593
    %613 = vmatprep.subr.mxu0 0.0
    %614 = vmatpush1.msra.mxu0 %v594
    %615 = vmatprep.subr.mxu0 0.0
    %616 = vmatpush1.msra.mxu0 %v595
    %617 = vmatprep.subr.mxu0 0.0
    %618 = vmatpush1.msra.mxu0 %v596
    %619 = vmatprep.subr.mxu0 0.0
    %620 = vmatpush1.msra.mxu0 %v597
    %621 = vmatprep.subr.mxu0 0.0
    %622 = vmatpush1.msra.mxu0 %v598
    %623 = vmatprep.subr.mxu0 0.0
    %624 = vmatpush1.msra.mxu0 %v599
    %625 = vmatprep.subr.mxu0 0.0
    %626 = vmatpush1.msra.mxu0 %v600
    %627 = vmatprep.subr.mxu0 0.0
    %628 = vmatpush1.msra.mxu0 %v601
    %629 = vmatprep.subr.mxu0 0.0
    %630 = vmatpush1.msra.mxu0 %v602
    %631 = vmatprep.subr.mxu0 0.0
    %632 = vmatpush1.msra.mxu0 %v603
    %633 = vmatprep.subr.mxu0 0.0
    %634 = vmatpush1.msra.mxu0 %v604
    %635 = vmatprep.subr.mxu0 0.0
    %636 = vmatpush1.msra.mxu0 %v605
    %637 = vmatprep.subr.mxu0 0.0
    %638 = vmatpush1.msra.mxu0 %v606
    %639 = vmatprep.subr.mxu0 0.0
    %640 = vmatpush1.msra.mxu0 0.0
    %641 = vmatprep.subr.mxu0 0.0
    %642 = vmatpush1.msra.mxu0 0.0
    %643 = vmatprep.subr.mxu0 0.0
    %644 = vmatpush1.msra.mxu0 0.0
    %645 = vmatprep.subr.mxu0 0.0
    %646 = vmatpush1.msra.mxu0 0.0
    %647 = vmatprep.subr.mxu0 0.0
    %648 = vmatpush1.msra.mxu0 0.0
    %649 = vmatprep.subr.mxu0 0.0
    %650 = vmatpush1.msra.mxu0 0.0
    %651 = vmatprep.subr.mxu0 0.0
    %652 = vmatpush1.msra.mxu0 0.0
    %653 = vmatprep.subr.mxu0 0.0
    %654 = vmatpush1.msra.mxu0 0.0
    %655 = vmatprep.subr.mxu0 0.0
    %656 = vmatpush1.msra.mxu0 0.0
    %657 = vmatprep.subr.mxu0 0.0
    %658 = vmatpush1.msra.mxu0 0.0
    %659 = vmatprep.subr.mxu0 0.0
    %660 = vmatpush1.msra.mxu0 0.0
    %661 = vmatprep.subr.mxu0 0.0
    %662 = vmatpush1.msra.mxu0 0.0
    %663 = vmatprep.subr.mxu0 0.0
    %664 = vmatpush1.msra.mxu0 0.0
    %665 = vmatprep.subr.mxu0 0.0
    %666 = vmatpush1.msra.mxu0 0.0
    %667 = vmatprep.subr.mxu0 0.0
    %668 = vmatpush1.msra.mxu0 0.0
    %669 = vmatprep.subr.mxu0 0.0
    %670 = vmatpush1.msra.mxu0 0.0
    %671 = vmatprep.mubr.f32.mxu0 0.0
    %672 = vmatmul.mubr.f32.gmra.mrb[0].mxu0 %v587
    %v673 = vpop.f32.mrb[0].mxu0
    %v674 = vadd.f32 0.0, %v673
    %v675 = vpop.f32.mrb[0].mxu0
    %676 = vmatprep.mubr.f32.mxu0 0.0
    %677 = vmatmul.mubr.f32.gmra.mrb[0].mxu0 %v588
    %v678 = vpop.f32.mrb[0].mxu0
    %v679 = vadd.f32 0.0, %v678
    %v680 = vpop.f32.mrb[0].mxu0
    %681 = vmatprep.mubr.f32.mxu0 0.0
    %682 = vmatmul.mubr.f32.gmra.mrb[0].mxu0 %v589
    %v683 = vpop.f32.mrb[0].mxu0
    %v684 = vadd.f32 0.0, %v683
    %v685 = vpop.f32.mrb[0].mxu0
    %686 = vmatprep.mubr.f32.mxu0 0.0
    %687 = vmatmul.mubr.f32.gmra.mrb[0].mxu0 %v590
    %v688 = vpop.f32.mrb[0].mxu0
    %v689 = vadd.f32 0.0, %v688
    %v690 = vpop.f32.mrb[0].mxu0
    %691 = vdwg.mxu0
    %v692 = vadd.f32 %v674, %v79
    %v693 = vadd.f32 %v679, %v80
    %v694 = vadd.f32 %v684, %v81
    %v695 = vadd.f32 %v689, %v82
    %696 = vst [vmem:[#allocation10] sm:$0xff] %v692
    %697 = vst [vmem:[#allocation10 + $0x8] sm:$0xff] %v693
    %698 = vst [vmem:[#allocation10 + $0x10] sm:$0xff] %v694
    %699 = vst [vmem:[#allocation10 + $0x18] sm:$0xff] %v695
    // Predicated region
    $region54: #{tpu_custom_call.1} parent=1 // pred_check
      _
    $region55: #{tpu_custom_call.1} parent=1 // pred_check_branch
      %701 = sbr.rel (0) target = $region57
    $region56: #{tpu_custom_call.1} parent=1 // pred_region
      %s703 = ssub.s32 512, 512
      %704 = vsyncadd [#allocation6], %s703
      %s705 = sshll.u32 [#allocation10], 4
      %s706 = int_to_ptr.vmem [resolvable:$true] %s705
      %711 = dma.vmem_to_hbm [thread:$0]  %s706, 512, %s10, [#allocation6], 128, 128, 8
    $region57: #{tpu_custom_call.1} parent=1 // pred_fallthru
      _
    // Predicated region
    $region58: #{tpu_custom_call.1} parent=1 // pred_check
      _
    $region59: #{tpu_custom_call.1} parent=1 // pred_check_branch
      %713 = sbr.rel (0) target = $region61
    $region60: #{tpu_custom_call.1} parent=1 // pred_region
      %714 = dma.done [#allocation6], 512
    $region61: #{tpu_custom_call.1} parent=1 // pred_fallthru
      _
    %715 = vsyncpa [#allocation5], 1
    %716 = vsyncpa [#allocation8], 1
    %717 = vsyncpa [#allocation6], 1

</llo_original>
